<compile_context>
chip_gen: v5e
topology: v5e:2x2
jax: 0.10.0
libtpu: 0.0.40
codegen_flags: <defaults>
</compile_context>

<pallas_src>
import functools

import jax
import jax.numpy as jnp
from jax import lax
from jax.experimental import pallas as pl
from jax.experimental.pallas import tpu as pltpu

HIDDEN = 128
SUBLANE = 8
LANE = 128


def _lstm_head_kernel(x_ref, wih_ref, whh_ref, b_ref, wout_ref, bout_ref,
                      out_ref, gates_ref, *, T, Bp, H):
    """x_ref:   (T*Bp, I)  bf16  time-major rows (batch padded to Bp)
       wih_ref: (I, 4H)    bf16  W_ih^T
       whh_ref: (H, 4H)    bf16  W_hh^T
       b_ref:   (1, 4H)    f32   b_ih + b_hh
       wout_ref:(H, Cp)    f32   W_out^T zero-padded to Cp lanes
       bout_ref:(1, Cp)    f32   b_out zero-padded
       out_ref: (Bp, Cp)   f32   padded logits
       gates_ref: (T*Bp, 4H) f32 VMEM scratch for the input projection."""
    # 1) Input projection for ALL timesteps in a single MXU matmul, bias folded
    #    in once; staged in VMEM scratch to bound register pressure.
    gates_ref[...] = (jnp.dot(x_ref[...], wih_ref[...],
                              preferred_element_type=jnp.float32)
                      + b_ref[...])                       # (T*Bp, 4H) f32

    h = jnp.zeros((Bp, H), jnp.float32)
    c = jnp.zeros((Bp, H), jnp.float32)

    # 2) Serial recurrence.  T is small and static: fully unrolled, every
    #    sublane slice start (t*Bp) is a multiple of 8, every lane slice is a
    #    multiple of 128.
    for t in range(T):
        g = gates_ref[pl.ds(t * Bp, Bp), :] + jnp.dot(
            h.astype(jnp.bfloat16), whh_ref[...],
            preferred_element_type=jnp.float32)           # (Bp, 4H) f32
        i_g = jax.nn.sigmoid(g[:, 0 * H:1 * H])
        f_g = jax.nn.sigmoid(g[:, 1 * H:2 * H])
        g_g = jnp.tanh(g[:, 2 * H:3 * H])
        o_g = jax.nn.sigmoid(g[:, 3 * H:4 * H])
        c = f_g * c + i_g * g_g
        h = o_g * jnp.tanh(c)

    # 3) Fused classifier head (f32, exact), lane-dense padded output slab.
    out_ref[...] = (jnp.dot(h, wout_ref[...],
                            preferred_element_type=jnp.float32)
                    + bout_ref[...])                      # (Bp, Cp) unmasked vst


@jax.jit
def rnn_forward(x, w_ih, w_hh, b_ih, b_hh, w_out, b_out):
    """x: (B, T, I) float32.  Returns (B, class_n) float32."""
    B, T, I = x.shape
    H = HIDDEN
    C = w_out.shape[0]

    Bp = ((B + SUBLANE - 1) // SUBLANE) * SUBLANE          # sublane-pad batch
    Cp = ((C + LANE - 1) // LANE) * LANE                   # lane-pad classes

    # Time-major, batch-padded rows: timestep t occupies rows [t*Bp, (t+1)*Bp).
    x_tm = jnp.transpose(x, (1, 0, 2))                     # (T, B, I)
    x_pad = jnp.zeros((T, Bp, I), x.dtype).at[:, :B, :].set(x_tm)
    x_tb = x_pad.reshape(T * Bp, I).astype(jnp.bfloat16)

    wih_t = jnp.transpose(w_ih, (1, 0)).astype(jnp.bfloat16)    # (I, 4H)
    whh_t = jnp.transpose(w_hh, (1, 0)).astype(jnp.bfloat16)    # (H, 4H)
    bias = (b_ih + b_hh).reshape(1, 4 * H).astype(jnp.float32)  # (1, 4H)

    wout_pad = jnp.zeros((H, Cp), jnp.float32).at[:, :C].set(
        jnp.transpose(w_out, (1, 0)).astype(jnp.float32))       # (H, Cp)
    bout_pad = jnp.zeros((1, Cp), jnp.float32).at[:, :C].set(
        b_out.reshape(1, C).astype(jnp.float32))                # (1, Cp)

    kernel = functools.partial(_lstm_head_kernel, T=T, Bp=Bp, H=H)

    out_pad = pl.pallas_call(
        kernel,
        out_shape=jax.ShapeDtypeStruct((Bp, Cp), jnp.float32),
        grid=(1,),
        in_specs=[
            pl.BlockSpec((T * Bp, I), lambda i: (0, 0)),   # all timesteps at once
            pl.BlockSpec((I, 4 * H), lambda i: (0, 0)),    # W_ih^T
            pl.BlockSpec((H, 4 * H), lambda i: (0, 0)),    # W_hh^T
            pl.BlockSpec((1, 4 * H), lambda i: (0, 0)),    # fused bias
            pl.BlockSpec((H, Cp), lambda i: (0, 0)),       # W_out^T (padded)
            pl.BlockSpec((1, Cp), lambda i: (0, 0)),       # b_out (padded)
        ],
        out_specs=pl.BlockSpec((Bp, Cp), lambda i: (0, 0)),
        scratch_shapes=[pltpu.VMEM((T * Bp, 4 * H), jnp.float32)],
        compiler_params=pltpu.CompilerParams(
            dimension_semantics=("arbitrary",)),
    )(x_tb, wih_t, whh_t, bias, wout_pad, bout_pad)

    return out_pad[:B, :C]


def rnn_reference(x, w_ih, w_hh, b_ih, b_hh, w_out, b_out):
    B, T, I = x.shape
    H = HIDDEN

    def step(carry, x_t):
        h, c = carry
        gates = x_t @ w_ih.T + h @ w_hh.T + b_ih + b_hh
        i_g = jax.nn.sigmoid(gates[:, 0 * H:1 * H])
        f_g = jax.nn.sigmoid(gates[:, 1 * H:2 * H])
        g_g = jnp.tanh(gates[:, 2 * H:3 * H])
        o_g = jax.nn.sigmoid(gates[:, 3 * H:4 * H])
        c_new = f_g * c + i_g * g_g
        h_new = o_g * jnp.tanh(c_new)
        return (h_new, c_new), None

    h0 = jnp.zeros((B, H), jnp.float32)
    c0 = jnp.zeros((B, H), jnp.float32)
    (h_T, _), _ = lax.scan(step, (h0, c0), jnp.transpose(x, (1, 0, 2)))
    return h_T @ w_out.T + b_out


if __name__ == "__main__":
    B, T, I = 2, 8, 16        # batch, seq len, Input_Size
    H = HIDDEN                # hidden_size = 128 (fixed by the module)
    C = 4                     # class_n

    key = jax.random.PRNGKey(0)
    k = jax.random.split(key, 7)
    scale = 1.0 / jnp.sqrt(H)

    x     = jax.random.normal(k[0], (B, T, I), jnp.float32)
    w_ih  = jax.random.uniform(k[1], (4 * H, I), jnp.float32, -scale, scale)
    w_hh  = jax.random.uniform(k[2], (4 * H, H), jnp.float32, -scale, scale)
    b_ih  = jax.random.uniform(k[3], (4 * H,),   jnp.float32, -scale, scale)
    b_hh  = jax.random.uniform(k[4], (4 * H,),   jnp.float32, -scale, scale)
    # Linear head init per initialize_weights(): N(0, 0.01) weights, zero bias.
    w_out = 0.01 * jax.random.normal(k[5], (C, H), jnp.float32)
    b_out = jnp.zeros((C,), jnp.float32)

    out = rnn_forward(x, w_ih, w_hh, b_ih, b_hh, w_out, b_out)
    out = jax.block_until_ready(out)

    ref = rnn_reference(x, w_ih, w_hh, b_ih, b_hh, w_out, b_out)
    assert out.shape == (B, C)
    # bf16 MXU operands (f32 accumulation) -> loosened tolerance vs f32 ref.
    assert jnp.allclose(out, ref, atol=2e-2, rtol=2e-2), (
        out, ref, jnp.max(jnp.abs(out - ref)))

    print("KERNEL_OK")
</pallas_src>

<mosaic_0001>
module attributes {stable_mosaic.version = 11 : i64} {
  func.func @_lstm_head_kernel(%arg0: i32, %arg1: memref<64x16xbf16, #tpu.memory_space<vmem>>, %arg2: memref<16x512xbf16, #tpu.memory_space<vmem>>, %arg3: memref<128x512xbf16, #tpu.memory_space<vmem>>, %arg4: memref<1x512xf32, #tpu.memory_space<vmem>>, %arg5: memref<128x128xf32, #tpu.memory_space<vmem>>, %arg6: memref<1x128xf32, #tpu.memory_space<vmem>>, %arg7: memref<8x128xf32, #tpu.memory_space<vmem>>, %arg8: memref<64x512xf32, #tpu.memory_space<vmem>>) attributes {dimension_semantics = [#tpu.dimension_semantics<arbitrary>], iteration_bounds = array<i64: 1>, scalar_prefetch = 0 : i64, scratch_operands = 1 : i64, tpu.core_type = #tpu.core_type<tc>, window_params = [{pipeline_mode = #tpu.pipeline_mode<synchronous>, transform_indices = @transform_0, window_bounds = array<i64: 64, 16>}, {pipeline_mode = #tpu.pipeline_mode<synchronous>, transform_indices = @transform_1, window_bounds = array<i64: 16, 512>}, {pipeline_mode = #tpu.pipeline_mode<synchronous>, transform_indices = @transform_2, window_bounds = array<i64: 128, 512>}, {pipeline_mode = #tpu.pipeline_mode<synchronous>, transform_indices = @transform_3, window_bounds = array<i64: 1, 512>}, {pipeline_mode = #tpu.pipeline_mode<synchronous>, transform_indices = @transform_4, window_bounds = array<i64: 128, 128>}, {pipeline_mode = #tpu.pipeline_mode<synchronous>, transform_indices = @transform_5, window_bounds = array<i64: 1, 128>}, {pipeline_mode = #tpu.pipeline_mode<synchronous>, transform_indices = @transform_6, window_bounds = array<i64: 8, 128>}]} {
    %c0 = arith.constant 0 : index
    %c0_0 = arith.constant 0 : index
    %0 = vector.load %arg1[%c0, %c0_0] : memref<64x16xbf16, #tpu.memory_space<vmem>>, vector<64x16xbf16>
    %c0_1 = arith.constant 0 : index
    %c0_2 = arith.constant 0 : index
    %1 = vector.load %arg2[%c0_1, %c0_2] : memref<16x512xbf16, #tpu.memory_space<vmem>>, vector<16x512xbf16>
    %cst = arith.constant dense<0.000000e+00> : vector<64x512xf32>
    %2 = tpu.matmul %0, %1, %cst {dimension_numbers = #tpu.dot_dimension_numbers<[1], [0], [0], [1], [0, 0, 1, 1], [], []>} : vector<64x16xbf16>, vector<16x512xbf16>, vector<64x512xf32> -> vector<64x512xf32>
    %c0_3 = arith.constant 0 : index
    %c0_4 = arith.constant 0 : index
    %3 = vector.load %arg4[%c0_3, %c0_4] : memref<1x512xf32, #tpu.memory_space<vmem>>, vector<1x512xf32>
    %4 = vector.broadcast %3 : vector<1x512xf32> to vector<64x512xf32>
    %5 = arith.addf %2, %4 : vector<64x512xf32>
    %c0_5 = arith.constant 0 : index
    %c0_6 = arith.constant 0 : index
    %6 = vector.load %arg8[%c0_5, %c0_6] : memref<64x512xf32, #tpu.memory_space<vmem>>, vector<64x512xf32>
    tpu.vector_store %arg8[%c0_5, %c0_6], %5 {strides = array<i32>} : memref<64x512xf32, #tpu.memory_space<vmem>>, vector<64x512xf32>,
    %cst_7 = arith.constant 0.000000e+00 : f32
    %7 = vector.broadcast %cst_7 : f32 to vector<8x128xf32>
    %cst_8 = arith.constant 0.000000e+00 : f32
    %8 = vector.broadcast %cst_8 : f32 to vector<8x128xf32>
    %c0_9 = arith.constant 0 : index
    %c0_10 = arith.constant 0 : index
    %9 = vector.load %arg8[%c0_9, %c0_10] : memref<64x512xf32, #tpu.memory_space<vmem>>, vector<8x512xf32>
    %10 = arith.truncf %7 : vector<8x128xf32> to vector<8x128xbf16>
    %c0_11 = arith.constant 0 : index
    %c0_12 = arith.constant 0 : index
    %11 = vector.load %arg3[%c0_11, %c0_12] : memref<128x512xbf16, #tpu.memory_space<vmem>>, vector<128x512xbf16>
    %cst_13 = arith.constant dense<0.000000e+00> : vector<8x512xf32>
    %12 = tpu.matmul %10, %11, %cst_13 {dimension_numbers = #tpu.dot_dimension_numbers<[1], [0], [0], [1], [0, 0, 1, 1], [], []>} : vector<8x128xbf16>, vector<128x512xbf16>, vector<8x512xf32> -> vector<8x512xf32>
    %13 = arith.addf %9, %12 : vector<8x512xf32>
    %14 = vector.extract_strided_slice %13 {offsets = [0, 0], sizes = [8, 128], strides = [1, 1]} : vector<8x512xf32> to vector<8x128xf32>
    %15 = arith.negf %14 : vector<8x128xf32>
    %16 = math.exp %15 : vector<8x128xf32>
    %cst_14 = arith.constant 1.000000e+00 : f32
    %17 = vector.broadcast %cst_14 : f32 to vector<8x128xf32>
    %18 = arith.addf %17, %16 : vector<8x128xf32>
    %19 = arith.divf %17, %18 : vector<8x128xf32>
    %20 = vector.extract_strided_slice %13 {offsets = [0, 128], sizes = [8, 128], strides = [1, 1]} : vector<8x512xf32> to vector<8x128xf32>
    %21 = arith.negf %20 : vector<8x128xf32>
    %22 = math.exp %21 : vector<8x128xf32>
    %cst_15 = arith.constant 1.000000e+00 : f32
    %23 = vector.broadcast %cst_15 : f32 to vector<8x128xf32>
    %24 = arith.addf %23, %22 : vector<8x128xf32>
    %25 = arith.divf %23, %24 : vector<8x128xf32>
    %26 = vector.extract_strided_slice %13 {offsets = [0, 256], sizes = [8, 128], strides = [1, 1]} : vector<8x512xf32> to vector<8x128xf32>
    %27 = math.tanh %26 : vector<8x128xf32>
    %28 = vector.extract_strided_slice %13 {offsets = [0, 384], sizes = [8, 128], strides = [1, 1]} : vector<8x512xf32> to vector<8x128xf32>
    %29 = arith.negf %28 : vector<8x128xf32>
    %30 = math.exp %29 : vector<8x128xf32>
    %cst_16 = arith.constant 1.000000e+00 : f32
    %31 = vector.broadcast %cst_16 : f32 to vector<8x128xf32>
    %32 = arith.addf %31, %30 : vector<8x128xf32>
    %33 = arith.divf %31, %32 : vector<8x128xf32>
    %34 = arith.mulf %25, %8 : vector<8x128xf32>
    %35 = arith.mulf %19, %27 : vector<8x128xf32>
    %36 = arith.addf %34, %35 : vector<8x128xf32>
    %37 = math.tanh %36 : vector<8x128xf32>
    %38 = arith.mulf %33, %37 : vector<8x128xf32>
    %c8 = arith.constant 8 : index
    %c0_17 = arith.constant 0 : index
    %39 = vector.load %arg8[%c8, %c0_17] : memref<64x512xf32, #tpu.memory_space<vmem>>, vector<8x512xf32>
    %40 = arith.truncf %38 : vector<8x128xf32> to vector<8x128xbf16>
    %c0_18 = arith.constant 0 : index
    %c0_19 = arith.constant 0 : index
    %41 = vector.load %arg3[%c0_18, %c0_19] : memref<128x512xbf16, #tpu.memory_space<vmem>>, vector<128x512xbf16>
    %cst_20 = arith.constant dense<0.000000e+00> : vector<8x512xf32>
    %42 = tpu.matmul %40, %41, %cst_20 {dimension_numbers = #tpu.dot_dimension_numbers<[1], [0], [0], [1], [0, 0, 1, 1], [], []>} : vector<8x128xbf16>, vector<128x512xbf16>, vector<8x512xf32> -> vector<8x512xf32>
    %43 = arith.addf %39, %42 : vector<8x512xf32>
    %44 = vector.extract_strided_slice %43 {offsets = [0, 0], sizes = [8, 128], strides = [1, 1]} : vector<8x512xf32> to vector<8x128xf32>
    %45 = arith.negf %44 : vector<8x128xf32>
    %46 = math.exp %45 : vector<8x128xf32>
    %cst_21 = arith.constant 1.000000e+00 : f32
    %47 = vector.broadcast %cst_21 : f32 to vector<8x128xf32>
    %48 = arith.addf %47, %46 : vector<8x128xf32>
    %49 = arith.divf %47, %48 : vector<8x128xf32>
    %50 = vector.extract_strided_slice %43 {offsets = [0, 128], sizes = [8, 128], strides = [1, 1]} : vector<8x512xf32> to vector<8x128xf32>
    %51 = arith.negf %50 : vector<8x128xf32>
    %52 = math.exp %51 : vector<8x128xf32>
    %cst_22 = arith.constant 1.000000e+00 : f32
    %53 = vector.broadcast %cst_22 : f32 to vector<8x128xf32>
    %54 = arith.addf %53, %52 : vector<8x128xf32>
    %55 = arith.divf %53, %54 : vector<8x128xf32>
    %56 = vector.extract_strided_slice %43 {offsets = [0, 256], sizes = [8, 128], strides = [1, 1]} : vector<8x512xf32> to vector<8x128xf32>
    %57 = math.tanh %56 : vector<8x128xf32>
    %58 = vector.extract_strided_slice %43 {offsets = [0, 384], sizes = [8, 128], strides = [1, 1]} : vector<8x512xf32> to vector<8x128xf32>
    %59 = arith.negf %58 : vector<8x128xf32>
    %60 = math.exp %59 : vector<8x128xf32>
    %cst_23 = arith.constant 1.000000e+00 : f32
    %61 = vector.broadcast %cst_23 : f32 to vector<8x128xf32>
    %62 = arith.addf %61, %60 : vector<8x128xf32>
    %63 = arith.divf %61, %62 : vector<8x128xf32>
    %64 = arith.mulf %55, %36 : vector<8x128xf32>
    %65 = arith.mulf %49, %57 : vector<8x128xf32>
    %66 = arith.addf %64, %65 : vector<8x128xf32>
    %67 = math.tanh %66 : vector<8x128xf32>
    %68 = arith.mulf %63, %67 : vector<8x128xf32>
    %c16 = arith.constant 16 : index
    %c0_24 = arith.constant 0 : index
    %69 = vector.load %arg8[%c16, %c0_24] : memref<64x512xf32, #tpu.memory_space<vmem>>, vector<8x512xf32>
    %70 = arith.truncf %68 : vector<8x128xf32> to vector<8x128xbf16>
    %c0_25 = arith.constant 0 : index
    %c0_26 = arith.constant 0 : index
    %71 = vector.load %arg3[%c0_25, %c0_26] : memref<128x512xbf16, #tpu.memory_space<vmem>>, vector<128x512xbf16>
    %cst_27 = arith.constant dense<0.000000e+00> : vector<8x512xf32>
    %72 = tpu.matmul %70, %71, %cst_27 {dimension_numbers = #tpu.dot_dimension_numbers<[1], [0], [0], [1], [0, 0, 1, 1], [], []>} : vector<8x128xbf16>, vector<128x512xbf16>, vector<8x512xf32> -> vector<8x512xf32>
    %73 = arith.addf %69, %72 : vector<8x512xf32>
    %74 = vector.extract_strided_slice %73 {offsets = [0, 0], sizes = [8, 128], strides = [1, 1]} : vector<8x512xf32> to vector<8x128xf32>
    %75 = arith.negf %74 : vector<8x128xf32>
    %76 = math.exp %75 : vector<8x128xf32>
    %cst_28 = arith.constant 1.000000e+00 : f32
    %77 = vector.broadcast %cst_28 : f32 to vector<8x128xf32>
    %78 = arith.addf %77, %76 : vector<8x128xf32>
    %79 = arith.divf %77, %78 : vector<8x128xf32>
    %80 = vector.extract_strided_slice %73 {offsets = [0, 128], sizes = [8, 128], strides = [1, 1]} : vector<8x512xf32> to vector<8x128xf32>
    %81 = arith.negf %80 : vector<8x128xf32>
    %82 = math.exp %81 : vector<8x128xf32>
    %cst_29 = arith.constant 1.000000e+00 : f32
    %83 = vector.broadcast %cst_29 : f32 to vector<8x128xf32>
    %84 = arith.addf %83, %82 : vector<8x128xf32>
    %85 = arith.divf %83, %84 : vector<8x128xf32>
    %86 = vector.extract_strided_slice %73 {offsets = [0, 256], sizes = [8, 128], strides = [1, 1]} : vector<8x512xf32> to vector<8x128xf32>
    %87 = math.tanh %86 : vector<8x128xf32>
    %88 = vector.extract_strided_slice %73 {offsets = [0, 384], sizes = [8, 128], strides = [1, 1]} : vector<8x512xf32> to vector<8x128xf32>
    %89 = arith.negf %88 : vector<8x128xf32>
    %90 = math.exp %89 : vector<8x128xf32>
    %cst_30 = arith.constant 1.000000e+00 : f32
    %91 = vector.broadcast %cst_30 : f32 to vector<8x128xf32>
    %92 = arith.addf %91, %90 : vector<8x128xf32>
    %93 = arith.divf %91, %92 : vector<8x128xf32>
    %94 = arith.mulf %85, %66 : vector<8x128xf32>
    %95 = arith.mulf %79, %87 : vector<8x128xf32>
    %96 = arith.addf %94, %95 : vector<8x128xf32>
    %97 = math.tanh %96 : vector<8x128xf32>
    %98 = arith.mulf %93, %97 : vector<8x128xf32>
    %c24 = arith.constant 24 : index
    %c0_31 = arith.constant 0 : index
    %99 = vector.load %arg8[%c24, %c0_31] : memref<64x512xf32, #tpu.memory_space<vmem>>, vector<8x512xf32>
    %100 = arith.truncf %98 : vector<8x128xf32> to vector<8x128xbf16>
    %c0_32 = arith.constant 0 : index
    %c0_33 = arith.constant 0 : index
    %101 = vector.load %arg3[%c0_32, %c0_33] : memref<128x512xbf16, #tpu.memory_space<vmem>>, vector<128x512xbf16>
    %cst_34 = arith.constant dense<0.000000e+00> : vector<8x512xf32>
    %102 = tpu.matmul %100, %101, %cst_34 {dimension_numbers = #tpu.dot_dimension_numbers<[1], [0], [0], [1], [0, 0, 1, 1], [], []>} : vector<8x128xbf16>, vector<128x512xbf16>, vector<8x512xf32> -> vector<8x512xf32>
    %103 = arith.addf %99, %102 : vector<8x512xf32>
    %104 = vector.extract_strided_slice %103 {offsets = [0, 0], sizes = [8, 128], strides = [1, 1]} : vector<8x512xf32> to vector<8x128xf32>
    %105 = arith.negf %104 : vector<8x128xf32>
    %106 = math.exp %105 : vector<8x128xf32>
    %cst_35 = arith.constant 1.000000e+00 : f32
    %107 = vector.broadcast %cst_35 : f32 to vector<8x128xf32>
    %108 = arith.addf %107, %106 : vector<8x128xf32>
    %109 = arith.divf %107, %108 : vector<8x128xf32>
    %110 = vector.extract_strided_slice %103 {offsets = [0, 128], sizes = [8, 128], strides = [1, 1]} : vector<8x512xf32> to vector<8x128xf32>
    %111 = arith.negf %110 : vector<8x128xf32>
    %112 = math.exp %111 : vector<8x128xf32>
    %cst_36 = arith.constant 1.000000e+00 : f32
    %113 = vector.broadcast %cst_36 : f32 to vector<8x128xf32>
    %114 = arith.addf %113, %112 : vector<8x128xf32>
    %115 = arith.divf %113, %114 : vector<8x128xf32>
    %116 = vector.extract_strided_slice %103 {offsets = [0, 256], sizes = [8, 128], strides = [1, 1]} : vector<8x512xf32> to vector<8x128xf32>
    %117 = math.tanh %116 : vector<8x128xf32>
    %118 = vector.extract_strided_slice %103 {offsets = [0, 384], sizes = [8, 128], strides = [1, 1]} : vector<8x512xf32> to vector<8x128xf32>
    %119 = arith.negf %118 : vector<8x128xf32>
    %120 = math.exp %119 : vector<8x128xf32>
    %cst_37 = arith.constant 1.000000e+00 : f32
    %121 = vector.broadcast %cst_37 : f32 to vector<8x128xf32>
    %122 = arith.addf %121, %120 : vector<8x128xf32>
    %123 = arith.divf %121, %122 : vector<8x128xf32>
    %124 = arith.mulf %115, %96 : vector<8x128xf32>
    %125 = arith.mulf %109, %117 : vector<8x128xf32>
    %126 = arith.addf %124, %125 : vector<8x128xf32>
    %127 = math.tanh %126 : vector<8x128xf32>
    %128 = arith.mulf %123, %127 : vector<8x128xf32>
    %c32 = arith.constant 32 : index
    %c0_38 = arith.constant 0 : index
    %129 = vector.load %arg8[%c32, %c0_38] : memref<64x512xf32, #tpu.memory_space<vmem>>, vector<8x512xf32>
    %130 = arith.truncf %128 : vector<8x128xf32> to vector<8x128xbf16>
    %c0_39 = arith.constant 0 : index
    %c0_40 = arith.constant 0 : index
    %131 = vector.load %arg3[%c0_39, %c0_40] : memref<128x512xbf16, #tpu.memory_space<vmem>>, vector<128x512xbf16>
    %cst_41 = arith.constant dense<0.000000e+00> : vector<8x512xf32>
    %132 = tpu.matmul %130, %131, %cst_41 {dimension_numbers = #tpu.dot_dimension_numbers<[1], [0], [0], [1], [0, 0, 1, 1], [], []>} : vector<8x128xbf16>, vector<128x512xbf16>, vector<8x512xf32> -> vector<8x512xf32>
    %133 = arith.addf %129, %132 : vector<8x512xf32>
    %134 = vector.extract_strided_slice %133 {offsets = [0, 0], sizes = [8, 128], strides = [1, 1]} : vector<8x512xf32> to vector<8x128xf32>
    %135 = arith.negf %134 : vector<8x128xf32>
    %136 = math.exp %135 : vector<8x128xf32>
    %cst_42 = arith.constant 1.000000e+00 : f32
    %137 = vector.broadcast %cst_42 : f32 to vector<8x128xf32>
    %138 = arith.addf %137, %136 : vector<8x128xf32>
    %139 = arith.divf %137, %138 : vector<8x128xf32>
    %140 = vector.extract_strided_slice %133 {offsets = [0, 128], sizes = [8, 128], strides = [1, 1]} : vector<8x512xf32> to vector<8x128xf32>
    %141 = arith.negf %140 : vector<8x128xf32>
    %142 = math.exp %141 : vector<8x128xf32>
    %cst_43 = arith.constant 1.000000e+00 : f32
    %143 = vector.broadcast %cst_43 : f32 to vector<8x128xf32>
    %144 = arith.addf %143, %142 : vector<8x128xf32>
    %145 = arith.divf %143, %144 : vector<8x128xf32>
    %146 = vector.extract_strided_slice %133 {offsets = [0, 256], sizes = [8, 128], strides = [1, 1]} : vector<8x512xf32> to vector<8x128xf32>
    %147 = math.tanh %146 : vector<8x128xf32>
    %148 = vector.extract_strided_slice %133 {offsets = [0, 384], sizes = [8, 128], strides = [1, 1]} : vector<8x512xf32> to vector<8x128xf32>
    %149 = arith.negf %148 : vector<8x128xf32>
    %150 = math.exp %149 : vector<8x128xf32>
    %cst_44 = arith.constant 1.000000e+00 : f32
    %151 = vector.broadcast %cst_44 : f32 to vector<8x128xf32>
    %152 = arith.addf %151, %150 : vector<8x128xf32>
    %153 = arith.divf %151, %152 : vector<8x128xf32>
    %154 = arith.mulf %145, %126 : vector<8x128xf32>
    %155 = arith.mulf %139, %147 : vector<8x128xf32>
    %156 = arith.addf %154, %155 : vector<8x128xf32>
    %157 = math.tanh %156 : vector<8x128xf32>
    %158 = arith.mulf %153, %157 : vector<8x128xf32>
    %c40 = arith.constant 40 : index
    %c0_45 = arith.constant 0 : index
    %159 = vector.load %arg8[%c40, %c0_45] : memref<64x512xf32, #tpu.memory_space<vmem>>, vector<8x512xf32>
    %160 = arith.truncf %158 : vector<8x128xf32> to vector<8x128xbf16>
    %c0_46 = arith.constant 0 : index
    %c0_47 = arith.constant 0 : index
    %161 = vector.load %arg3[%c0_46, %c0_47] : memref<128x512xbf16, #tpu.memory_space<vmem>>, vector<128x512xbf16>
    %cst_48 = arith.constant dense<0.000000e+00> : vector<8x512xf32>
    %162 = tpu.matmul %160, %161, %cst_48 {dimension_numbers = #tpu.dot_dimension_numbers<[1], [0], [0], [1], [0, 0, 1, 1], [], []>} : vector<8x128xbf16>, vector<128x512xbf16>, vector<8x512xf32> -> vector<8x512xf32>
    %163 = arith.addf %159, %162 : vector<8x512xf32>
    %164 = vector.extract_strided_slice %163 {offsets = [0, 0], sizes = [8, 128], strides = [1, 1]} : vector<8x512xf32> to vector<8x128xf32>
    %165 = arith.negf %164 : vector<8x128xf32>
    %166 = math.exp %165 : vector<8x128xf32>
    %cst_49 = arith.constant 1.000000e+00 : f32
    %167 = vector.broadcast %cst_49 : f32 to vector<8x128xf32>
    %168 = arith.addf %167, %166 : vector<8x128xf32>
    %169 = arith.divf %167, %168 : vector<8x128xf32>
    %170 = vector.extract_strided_slice %163 {offsets = [0, 128], sizes = [8, 128], strides = [1, 1]} : vector<8x512xf32> to vector<8x128xf32>
    %171 = arith.negf %170 : vector<8x128xf32>
    %172 = math.exp %171 : vector<8x128xf32>
    %cst_50 = arith.constant 1.000000e+00 : f32
    %173 = vector.broadcast %cst_50 : f32 to vector<8x128xf32>
    %174 = arith.addf %173, %172 : vector<8x128xf32>
    %175 = arith.divf %173, %174 : vector<8x128xf32>
    %176 = vector.extract_strided_slice %163 {offsets = [0, 256], sizes = [8, 128], strides = [1, 1]} : vector<8x512xf32> to vector<8x128xf32>
    %177 = math.tanh %176 : vector<8x128xf32>
    %178 = vector.extract_strided_slice %163 {offsets = [0, 384], sizes = [8, 128], strides = [1, 1]} : vector<8x512xf32> to vector<8x128xf32>
    %179 = arith.negf %178 : vector<8x128xf32>
    %180 = math.exp %179 : vector<8x128xf32>
    %cst_51 = arith.constant 1.000000e+00 : f32
    %181 = vector.broadcast %cst_51 : f32 to vector<8x128xf32>
    %182 = arith.addf %181, %180 : vector<8x128xf32>
    %183 = arith.divf %181, %182 : vector<8x128xf32>
    %184 = arith.mulf %175, %156 : vector<8x128xf32>
    %185 = arith.mulf %169, %177 : vector<8x128xf32>
    %186 = arith.addf %184, %185 : vector<8x128xf32>
    %187 = math.tanh %186 : vector<8x128xf32>
    %188 = arith.mulf %183, %187 : vector<8x128xf32>
    %c48 = arith.constant 48 : index
    %c0_52 = arith.constant 0 : index
    %189 = vector.load %arg8[%c48, %c0_52] : memref<64x512xf32, #tpu.memory_space<vmem>>, vector<8x512xf32>
    %190 = arith.truncf %188 : vector<8x128xf32> to vector<8x128xbf16>
    %c0_53 = arith.constant 0 : index
    %c0_54 = arith.constant 0 : index
    %191 = vector.load %arg3[%c0_53, %c0_54] : memref<128x512xbf16, #tpu.memory_space<vmem>>, vector<128x512xbf16>
    %cst_55 = arith.constant dense<0.000000e+00> : vector<8x512xf32>
    %192 = tpu.matmul %190, %191, %cst_55 {dimension_numbers = #tpu.dot_dimension_numbers<[1], [0], [0], [1], [0, 0, 1, 1], [], []>} : vector<8x128xbf16>, vector<128x512xbf16>, vector<8x512xf32> -> vector<8x512xf32>
    %193 = arith.addf %189, %192 : vector<8x512xf32>
    %194 = vector.extract_strided_slice %193 {offsets = [0, 0], sizes = [8, 128], strides = [1, 1]} : vector<8x512xf32> to vector<8x128xf32>
    %195 = arith.negf %194 : vector<8x128xf32>
    %196 = math.exp %195 : vector<8x128xf32>
    %cst_56 = arith.constant 1.000000e+00 : f32
    %197 = vector.broadcast %cst_56 : f32 to vector<8x128xf32>
    %198 = arith.addf %197, %196 : vector<8x128xf32>
    %199 = arith.divf %197, %198 : vector<8x128xf32>
    %200 = vector.extract_strided_slice %193 {offsets = [0, 128], sizes = [8, 128], strides = [1, 1]} : vector<8x512xf32> to vector<8x128xf32>
    %201 = arith.negf %200 : vector<8x128xf32>
    %202 = math.exp %201 : vector<8x128xf32>
    %cst_57 = arith.constant 1.000000e+00 : f32
    %203 = vector.broadcast %cst_57 : f32 to vector<8x128xf32>
    %204 = arith.addf %203, %202 : vector<8x128xf32>
    %205 = arith.divf %203, %204 : vector<8x128xf32>
    %206 = vector.extract_strided_slice %193 {offsets = [0, 256], sizes = [8, 128], strides = [1, 1]} : vector<8x512xf32> to vector<8x128xf32>
    %207 = math.tanh %206 : vector<8x128xf32>
    %208 = vector.extract_strided_slice %193 {offsets = [0, 384], sizes = [8, 128], strides = [1, 1]} : vector<8x512xf32> to vector<8x128xf32>
    %209 = arith.negf %208 : vector<8x128xf32>
    %210 = math.exp %209 : vector<8x128xf32>
    %cst_58 = arith.constant 1.000000e+00 : f32
    %211 = vector.broadcast %cst_58 : f32 to vector<8x128xf32>
    %212 = arith.addf %211, %210 : vector<8x128xf32>
    %213 = arith.divf %211, %212 : vector<8x128xf32>
    %214 = arith.mulf %205, %186 : vector<8x128xf32>
    %215 = arith.mulf %199, %207 : vector<8x128xf32>
    %216 = arith.addf %214, %215 : vector<8x128xf32>
    %217 = math.tanh %216 : vector<8x128xf32>
    %218 = arith.mulf %213, %217 : vector<8x128xf32>
    %c56 = arith.constant 56 : index
    %c0_59 = arith.constant 0 : index
    %219 = vector.load %arg8[%c56, %c0_59] : memref<64x512xf32, #tpu.memory_space<vmem>>, vector<8x512xf32>
    %220 = arith.truncf %218 : vector<8x128xf32> to vector<8x128xbf16>
    %c0_60 = arith.constant 0 : index
    %c0_61 = arith.constant 0 : index
    %221 = vector.load %arg3[%c0_60, %c0_61] : memref<128x512xbf16, #tpu.memory_space<vmem>>, vector<128x512xbf16>
    %cst_62 = arith.constant dense<0.000000e+00> : vector<8x512xf32>
    %222 = tpu.matmul %220, %221, %cst_62 {dimension_numbers = #tpu.dot_dimension_numbers<[1], [0], [0], [1], [0, 0, 1, 1], [], []>} : vector<8x128xbf16>, vector<128x512xbf16>, vector<8x512xf32> -> vector<8x512xf32>
    %223 = arith.addf %219, %222 : vector<8x512xf32>
    %224 = vector.extract_strided_slice %223 {offsets = [0, 0], sizes = [8, 128], strides = [1, 1]} : vector<8x512xf32> to vector<8x128xf32>
    %225 = arith.negf %224 : vector<8x128xf32>
    %226 = math.exp %225 : vector<8x128xf32>
    %cst_63 = arith.constant 1.000000e+00 : f32
    %227 = vector.broadcast %cst_63 : f32 to vector<8x128xf32>
    %228 = arith.addf %227, %226 : vector<8x128xf32>
    %229 = arith.divf %227, %228 : vector<8x128xf32>
    %230 = vector.extract_strided_slice %223 {offsets = [0, 128], sizes = [8, 128], strides = [1, 1]} : vector<8x512xf32> to vector<8x128xf32>
    %231 = arith.negf %230 : vector<8x128xf32>
    %232 = math.exp %231 : vector<8x128xf32>
    %cst_64 = arith.constant 1.000000e+00 : f32
    %233 = vector.broadcast %cst_64 : f32 to vector<8x128xf32>
    %234 = arith.addf %233, %232 : vector<8x128xf32>
    %235 = arith.divf %233, %234 : vector<8x128xf32>
    %236 = vector.extract_strided_slice %223 {offsets = [0, 256], sizes = [8, 128], strides = [1, 1]} : vector<8x512xf32> to vector<8x128xf32>
    %237 = math.tanh %236 : vector<8x128xf32>
    %238 = vector.extract_strided_slice %223 {offsets = [0, 384], sizes = [8, 128], strides = [1, 1]} : vector<8x512xf32> to vector<8x128xf32>
    %239 = arith.negf %238 : vector<8x128xf32>
    %240 = math.exp %239 : vector<8x128xf32>
    %cst_65 = arith.constant 1.000000e+00 : f32
    %241 = vector.broadcast %cst_65 : f32 to vector<8x128xf32>
    %242 = arith.addf %241, %240 : vector<8x128xf32>
    %243 = arith.divf %241, %242 : vector<8x128xf32>
    %244 = arith.mulf %235, %216 : vector<8x128xf32>
    %245 = arith.mulf %229, %237 : vector<8x128xf32>
    %246 = arith.addf %244, %245 : vector<8x128xf32>
    %247 = math.tanh %246 : vector<8x128xf32>
    %248 = arith.mulf %243, %247 : vector<8x128xf32>
    %c0_66 = arith.constant 0 : index
    %c0_67 = arith.constant 0 : index
    %249 = vector.load %arg5[%c0_66, %c0_67] : memref<128x128xf32, #tpu.memory_space<vmem>>, vector<128x128xf32>
    %cst_68 = arith.constant dense<0.000000e+00> : vector<8x128xf32>
    %250 = tpu.matmul %248, %249, %cst_68 {dimension_numbers = #tpu.dot_dimension_numbers<[1], [0], [0], [1], [0, 0, 1, 1], [], []>} : vector<8x128xf32>, vector<128x128xf32>, vector<8x128xf32> -> vector<8x128xf32>
    %c0_69 = arith.constant 0 : index
    %c0_70 = arith.constant 0 : index
    %251 = vector.load %arg6[%c0_69, %c0_70] : memref<1x128xf32, #tpu.memory_space<vmem>>, vector<1x128xf32>
    %252 = vector.broadcast %251 : vector<1x128xf32> to vector<8x128xf32>
    %253 = arith.addf %250, %252 : vector<8x128xf32>
    %c0_71 = arith.constant 0 : index
    %c0_72 = arith.constant 0 : index
    %254 = vector.load %arg7[%c0_71, %c0_72] : memref<8x128xf32, #tpu.memory_space<vmem>>, vector<8x128xf32>
    tpu.vector_store %arg7[%c0_71, %c0_72], %253 {strides = array<i32>} : memref<8x128xf32, #tpu.memory_space<vmem>>, vector<8x128xf32>,
    return
  }
  func.func @transform_0(%arg0: i32) -> (i32, i32) {
    %c0_i32 = arith.constant 0 : i32
    %c0_i32_0 = arith.constant 0 : i32
    %c0_i32_1 = arith.constant 0 : i32
    return %c0_i32, %c0_i32_0 : i32, i32
  }
  func.func @transform_1(%arg0: i32) -> (i32, i32) {
    %c0_i32 = arith.constant 0 : i32
    %c0_i32_0 = arith.constant 0 : i32
    %c0_i32_1 = arith.constant 0 : i32
    return %c0_i32, %c0_i32_0 : i32, i32
  }
  func.func @transform_2(%arg0: i32) -> (i32, i32) {
    %c0_i32 = arith.constant 0 : i32
    %c0_i32_0 = arith.constant 0 : i32
    %c0_i32_1 = arith.constant 0 : i32
    return %c0_i32, %c0_i32_0 : i32, i32
  }
  func.func @transform_3(%arg0: i32) -> (i32, i32) {
    %c0_i32 = arith.constant 0 : i32
    %c0_i32_0 = arith.constant 0 : i32
    %c0_i32_1 = arith.constant 0 : i32
    return %c0_i32, %c0_i32_0 : i32, i32
  }
  func.func @transform_4(%arg0: i32) -> (i32, i32) {
    %c0_i32 = arith.constant 0 : i32
    %c0_i32_0 = arith.constant 0 : i32
    %c0_i32_1 = arith.constant 0 : i32
    return %c0_i32, %c0_i32_0 : i32, i32
  }
  func.func @transform_5(%arg0: i32) -> (i32, i32) {
    %c0_i32 = arith.constant 0 : i32
    %c0_i32_0 = arith.constant 0 : i32
    %c0_i32_1 = arith.constant 0 : i32
    return %c0_i32, %c0_i32_0 : i32, i32
  }
  func.func @transform_6(%arg0: i32) -> (i32, i32) {
    %c0_i32 = arith.constant 0 : i32
    %c0_i32_0 = arith.constant 0 : i32
    %c0_i32_1 = arith.constant 0 : i32
    return %c0_i32, %c0_i32_0 : i32, i32
  }
}

</mosaic_0001>

<llo_original>
// kernel: rnn_forward.1
$region0: #{rnn_forward.1}
  #allocation0 [shape = 'u32[]', space=smem, size = 0x4, offset = 0x4, fixed_abs, tag = 'smem constant byte address 0x4 - core index']
  #allocation1 [shape = 'u32[72,128]{1,0:T(1,128)}', space=vmem, size = 0x9000, scoped, tag = 'internal scratch']
  #allocation2 [shape = 'f32[64,512]{1,0:T(8,128)}', space=vmem, size = 0x20000, scoped, tag = 'scratch operand']
  %s0 = inlined_call_operand.vmem [shape: bf16[64,16], index: 0, kind: input, shape index: {}]
  %s1 = inlined_call_operand.vmem [shape: bf16[16,512], index: 1, kind: input, shape index: {}]
  %s2 = inlined_call_operand.vmem [shape: bf16[128,512], index: 2, kind: input, shape index: {}]
  %s3 = inlined_call_operand.vmem [shape: f32[1,512], index: 3, kind: input, shape index: {}]
  %s4 = inlined_call_operand.vmem [shape: f32[128,128], index: 4, kind: input, shape index: {}]
  %s5 = inlined_call_operand.vmem [shape: f32[1,128], index: 5, kind: input, shape index: {}]
  %s6 = inlined_call_operand.vmem [shape: f32[8,128], index: 6, kind: output, shape index: {}]
  %s7 = sld [smem:[#allocation0]]
  $region34: #{rnn_forward.1} parent=0
    _
  %s9 = ssub.s32 1, %s7
  %s10 = scalar_select 0, %s9, %s7
  // Predicated region
  $region2: #{rnn_forward.1} parent=0 // pred_check
    _
  $region3: #{rnn_forward.1} parent=0 // pred_check_branch
    %12 = sbr.rel (0) target = $region5
  $region4: #{rnn_forward.1} parent=0 // pred_region
    _
  $region5: #{rnn_forward.1} parent=0 // pred_fallthru
    _
  // Predicated region
  $region6: #{rnn_forward.1} parent=0 // pred_check
    _
  $region7: #{rnn_forward.1} parent=0 // pred_check_branch
    %14 = sbr.rel (0) target = $region9
  $region8: #{rnn_forward.1} parent=0 // pred_region
    _
  $region9: #{rnn_forward.1} parent=0 // pred_fallthru
    _
  // Predicated region
  $region10: #{rnn_forward.1} parent=0 // pred_check
    _
  $region11: #{rnn_forward.1} parent=0 // pred_check_branch
    %16 = sbr.rel (0) target = $region13
  $region12: #{rnn_forward.1} parent=0 // pred_region
    _
  $region13: #{rnn_forward.1} parent=0 // pred_fallthru
    _
  // Predicated region
  $region14: #{rnn_forward.1} parent=0 // pred_check
    _
  $region15: #{rnn_forward.1} parent=0 // pred_check_branch
    %18 = sbr.rel (0) target = $region17
  $region16: #{rnn_forward.1} parent=0 // pred_region
    _
  $region17: #{rnn_forward.1} parent=0 // pred_fallthru
    _
  // Predicated region
  $region18: #{rnn_forward.1} parent=0 // pred_check
    _
  $region19: #{rnn_forward.1} parent=0 // pred_check_branch
    %20 = sbr.rel (0) target = $region21
  $region20: #{rnn_forward.1} parent=0 // pred_region
    _
  $region21: #{rnn_forward.1} parent=0 // pred_fallthru
    _
  // Predicated region
  $region22: #{rnn_forward.1} parent=0 // pred_check
    _
  $region23: #{rnn_forward.1} parent=0 // pred_check_branch
    %22 = sbr.rel (0) target = $region25
  $region24: #{rnn_forward.1} parent=0 // pred_region
    _
  $region25: #{rnn_forward.1} parent=0 // pred_fallthru
    _
  %v24 = vld [vmem:[%s0] sm:$0xf]
  %v25 = vld [vmem:[%s0 + $0x4] sm:$0xf]
  %v26 = vld [vmem:[%s0 + $0x8] sm:$0xf]
  %v27 = vld [vmem:[%s0 + $0xc] sm:$0xf]
  %v28 = vld [vmem:[%s0 + $0x10] sm:$0xf]
  %v29 = vld [vmem:[%s0 + $0x14] sm:$0xf]
  %v30 = vld [vmem:[%s0 + $0x18] sm:$0xf]
  %v31 = vld [vmem:[%s0 + $0x1c] sm:$0xf]
  %v32 = vld [vmem:[%s1] sm:$0xff]
  %v33 = vld [vmem:[%s1 + $0x8] sm:$0xff]
  %v34 = vld [vmem:[%s1 + $0x10] sm:$0xff]
  %v35 = vld [vmem:[%s1 + $0x18] sm:$0xff]
  %v36 = vld [vmem:[%s3] sm:$0xf]
  %v38 = vperm.slane %v36, 0
  %v39 = vperm.slane %v36, 1
  %v40 = vperm.slane %v36, 2
  %v41 = vperm.slane %v36, 3
  %v54 = vunpack.c.l.b16 %v24
  %v55 = vunpack.c.l.b16 %v25
  %v56 = vunpack.c.l.b16 %v26
  %v57 = vunpack.c.l.b16 %v27
  %v58 = vunpack.c.l.b16 %v28
  %v59 = vunpack.c.l.b16 %v29
  %v60 = vunpack.c.l.b16 %v30
  %v61 = vunpack.c.l.b16 %v31
  %v62 = vpack.c.b16 %v55, %v54
  %v63 = vpack.c.b16 %v57, %v56
  %v64 = vpack.c.b16 %v59, %v58
  %v65 = vpack.c.b16 %v61, %v60
  %v70 = vunpack.c.l.b16 %v32
  %v71 = vunpack.c.h.b16 %v32
  %v72 = vunpack.c.l.b16 %v33
  %v73 = vunpack.c.h.b16 %v33
  %v74 = vunpack.c.l.b16 %v34
  %v75 = vunpack.c.h.b16 %v34
  %v76 = vunpack.c.l.b16 %v35
  %v77 = vunpack.c.h.b16 %v35
  %v78 = vpack.c.b16 %v74, %v70
  %v79 = vpack.c.b16 %v75, %v71
  %v80 = vpack.c.b16 %v76, %v72
  %v81 = vpack.c.b16 %v77, %v73
  %vm86 = vcmask 130048
  %v88 = vsel %vm86, %v62, 0
  %v91 = vsel %vm86, %v63, 0
  %v94 = vsel %vm86, %v64, 0
  %v97 = vsel %vm86, %v65, 0
  %99 = vmatpush.bf16.msra.mxu0 0
  %100 = vmatpush.bf16.msra.mxu0 0
  %101 = vmatpush.bf16.msra.mxu0 0
  %102 = vmatpush.bf16.msra.mxu0 0
  %103 = vmatpush.bf16.msra.mxu0 0
  %104 = vmatpush.bf16.msra.mxu0 0
  %105 = vmatpush.bf16.msra.mxu0 0
  %106 = vmatpush.bf16.msra.mxu0 %v78
  %107 = vmatmul.bf16.gmra.mxu0 %v88
  %v108 = vpop.f32.mrf.mxu0
  %v109 = vadd.f32 %v38, %v108
  %v110 = vpop.f32.mrf.mxu0
  %v111 = vadd.f32 %v38, %v110
  %112 = vmatmul.bf16.gmra.mxu0 %v91
  %v113 = vpop.f32.mrf.mxu0
  %v114 = vadd.f32 %v38, %v113
  %v115 = vpop.f32.mrf.mxu0
  %v116 = vadd.f32 %v38, %v115
  %117 = vmatmul.bf16.gmra.mxu0 %v94
  %v118 = vpop.f32.mrf.mxu0
  %v119 = vadd.f32 %v38, %v118
  %v120 = vpop.f32.mrf.mxu0
  %v121 = vadd.f32 %v38, %v120
  %122 = vmatmul.bf16.gmra.mxu0 %v97
  %v123 = vpop.f32.mrf.mxu0
  %v124 = vadd.f32 %v38, %v123
  %v125 = vpop.f32.mrf.mxu0
  %v126 = vadd.f32 %v38, %v125
  %127 = vdwg.mxu0
  %128 = vmatpush.bf16.msra.mxu0 0
  %129 = vmatpush.bf16.msra.mxu0 0
  %130 = vmatpush.bf16.msra.mxu0 0
  %131 = vmatpush.bf16.msra.mxu0 0
  %132 = vmatpush.bf16.msra.mxu0 0
  %133 = vmatpush.bf16.msra.mxu0 0
  %134 = vmatpush.bf16.msra.mxu0 0
  %135 = vmatpush.bf16.msra.mxu0 %v79
  %136 = vmatmul.bf16.gmra.mxu0 %v88
  %v137 = vpop.f32.mrf.mxu0
  %v138 = vadd.f32 %v39, %v137
  %v139 = vpop.f32.mrf.mxu0
  %v140 = vadd.f32 %v39, %v139
  %141 = vmatmul.bf16.gmra.mxu0 %v91
  %v142 = vpop.f32.mrf.mxu0
  %v143 = vadd.f32 %v39, %v142
  %v144 = vpop.f32.mrf.mxu0
  %v145 = vadd.f32 %v39, %v144
  %146 = vmatmul.bf16.gmra.mxu0 %v94
  %v147 = vpop.f32.mrf.mxu0
  %v148 = vadd.f32 %v39, %v147
  %v149 = vpop.f32.mrf.mxu0
  %v150 = vadd.f32 %v39, %v149
  %151 = vmatmul.bf16.gmra.mxu0 %v97
  %v152 = vpop.f32.mrf.mxu0
  %v153 = vadd.f32 %v39, %v152
  %v154 = vpop.f32.mrf.mxu0
  %v155 = vadd.f32 %v39, %v154
  %156 = vdwg.mxu0
  %157 = vmatpush.bf16.msra.mxu0 0
  %158 = vmatpush.bf16.msra.mxu0 0
  %159 = vmatpush.bf16.msra.mxu0 0
  %160 = vmatpush.bf16.msra.mxu0 0
  %161 = vmatpush.bf16.msra.mxu0 0
  %162 = vmatpush.bf16.msra.mxu0 0
  %163 = vmatpush.bf16.msra.mxu0 0
  %164 = vmatpush.bf16.msra.mxu0 %v80
  %165 = vmatmul.bf16.gmra.mxu0 %v88
  %v166 = vpop.f32.mrf.mxu0
  %v167 = vadd.f32 %v40, %v166
  %v168 = vpop.f32.mrf.mxu0
  %v169 = vadd.f32 %v40, %v168
  %170 = vmatmul.bf16.gmra.mxu0 %v91
  %v171 = vpop.f32.mrf.mxu0
  %v172 = vadd.f32 %v40, %v171
  %v173 = vpop.f32.mrf.mxu0
  %v174 = vadd.f32 %v40, %v173
  %175 = vmatmul.bf16.gmra.mxu0 %v94
  %v176 = vpop.f32.mrf.mxu0
  %v177 = vadd.f32 %v40, %v176
  %v178 = vpop.f32.mrf.mxu0
  %v179 = vadd.f32 %v40, %v178
  %180 = vmatmul.bf16.gmra.mxu0 %v97
  %v181 = vpop.f32.mrf.mxu0
  %v182 = vadd.f32 %v40, %v181
  %v183 = vpop.f32.mrf.mxu0
  %v184 = vadd.f32 %v40, %v183
  %185 = vdwg.mxu0
  %186 = vmatpush.bf16.msra.mxu0 0
  %187 = vmatpush.bf16.msra.mxu0 0
  %188 = vmatpush.bf16.msra.mxu0 0
  %189 = vmatpush.bf16.msra.mxu0 0
  %190 = vmatpush.bf16.msra.mxu0 0
  %191 = vmatpush.bf16.msra.mxu0 0
  %192 = vmatpush.bf16.msra.mxu0 0
  %193 = vmatpush.bf16.msra.mxu0 %v81
  %194 = vmatmul.bf16.gmra.mxu0 %v88
  %v195 = vpop.f32.mrf.mxu0
  %v196 = vadd.f32 %v41, %v195
  %v197 = vpop.f32.mrf.mxu0
  %v198 = vadd.f32 %v41, %v197
  %199 = vmatmul.bf16.gmra.mxu0 %v91
  %v200 = vpop.f32.mrf.mxu0
  %v201 = vadd.f32 %v41, %v200
  %v202 = vpop.f32.mrf.mxu0
  %v203 = vadd.f32 %v41, %v202
  %204 = vmatmul.bf16.gmra.mxu0 %v94
  %v205 = vpop.f32.mrf.mxu0
  %v206 = vadd.f32 %v41, %v205
  %v207 = vpop.f32.mrf.mxu0
  %v208 = vadd.f32 %v41, %v207
  %209 = vmatmul.bf16.gmra.mxu0 %v97
  %v210 = vpop.f32.mrf.mxu0
  %v211 = vadd.f32 %v41, %v210
  %v212 = vpop.f32.mrf.mxu0
  %v213 = vadd.f32 %v41, %v212
  %214 = vdwg.mxu0
  %215 = vst [vmem:[#allocation2] sm:$0xff] %v109
  %216 = vst [vmem:[#allocation2 + $0x8] sm:$0xff] %v138
  %217 = vst [vmem:[#allocation2 + $0x10] sm:$0xff] %v167
  %218 = vst [vmem:[#allocation2 + $0x18] sm:$0xff] %v196
  %219 = vst [vmem:[#allocation2 + $0x20] sm:$0xff] %v111
  %220 = vst [vmem:[#allocation2 + $0x28] sm:$0xff] %v140
  %221 = vst [vmem:[#allocation2 + $0x30] sm:$0xff] %v169
  %222 = vst [vmem:[#allocation2 + $0x38] sm:$0xff] %v198
  %223 = vst [vmem:[#allocation2 + $0x40] sm:$0xff] %v114
  %224 = vst [vmem:[#allocation2 + $0x48] sm:$0xff] %v143
  %225 = vst [vmem:[#allocation2 + $0x50] sm:$0xff] %v172
  %226 = vst [vmem:[#allocation2 + $0x58] sm:$0xff] %v201
  %227 = vst [vmem:[#allocation2 + $0x60] sm:$0xff] %v116
  %228 = vst [vmem:[#allocation2 + $0x68] sm:$0xff] %v145
  %229 = vst [vmem:[#allocation2 + $0x70] sm:$0xff] %v174
  %230 = vst [vmem:[#allocation2 + $0x78] sm:$0xff] %v203
  %231 = vst [vmem:[#allocation2 + $0x80] sm:$0xff] %v119
  %232 = vst [vmem:[#allocation2 + $0x88] sm:$0xff] %v148
  %233 = vst [vmem:[#allocation2 + $0x90] sm:$0xff] %v177
  %234 = vst [vmem:[#allocation2 + $0x98] sm:$0xff] %v206
  %235 = vst [vmem:[#allocation2 + $0xa0] sm:$0xff] %v121
  %236 = vst [vmem:[#allocation2 + $0xa8] sm:$0xff] %v150
  %237 = vst [vmem:[#allocation2 + $0xb0] sm:$0xff] %v179
  %238 = vst [vmem:[#allocation2 + $0xb8] sm:$0xff] %v208
  %239 = vst [vmem:[#allocation2 + $0xc0] sm:$0xff] %v124
  %240 = vst [vmem:[#allocation2 + $0xc8] sm:$0xff] %v153
  %241 = vst [vmem:[#allocation2 + $0xd0] sm:$0xff] %v182
  %242 = vst [vmem:[#allocation2 + $0xd8] sm:$0xff] %v211
  %243 = vst [vmem:[#allocation2 + $0xe0] sm:$0xff] %v126
  %244 = vst [vmem:[#allocation2 + $0xe8] sm:$0xff] %v155
  %245 = vst [vmem:[#allocation2 + $0xf0] sm:$0xff] %v184
  %246 = vst [vmem:[#allocation2 + $0xf8] sm:$0xff] %v213
  %v247 = vld [vmem:[#allocation2] sm:$0xff]
  %v248 = vld [vmem:[#allocation2 + $0x8] sm:$0xff]
  %v249 = vld [vmem:[#allocation2 + $0x10] sm:$0xff]
  %v250 = vld [vmem:[#allocation2 + $0x18] sm:$0xff]
  %v251 = vld [vmem:[%s2] sm:$0xff]
  %v252 = vld [vmem:[%s2 + $0x8] sm:$0xff]
  %v253 = vld [vmem:[%s2 + $0x10] sm:$0xff]
  %v254 = vld [vmem:[%s2 + $0x18] sm:$0xff]
  %v255 = vld [vmem:[%s2 + $0x20] sm:$0xff]
  %v256 = vld [vmem:[%s2 + $0x28] sm:$0xff]
  %v257 = vld [vmem:[%s2 + $0x30] sm:$0xff]
  %v258 = vld [vmem:[%s2 + $0x38] sm:$0xff]
  %v259 = vld [vmem:[%s2 + $0x40] sm:$0xff]
  %v260 = vld [vmem:[%s2 + $0x48] sm:$0xff]
  %v261 = vld [vmem:[%s2 + $0x50] sm:$0xff]
  %v262 = vld [vmem:[%s2 + $0x58] sm:$0xff]
  %v263 = vld [vmem:[%s2 + $0x60] sm:$0xff]
  %v264 = vld [vmem:[%s2 + $0x68] sm:$0xff]
  %v265 = vld [vmem:[%s2 + $0x70] sm:$0xff]
  %v266 = vld [vmem:[%s2 + $0x78] sm:$0xff]
  %v267 = vld [vmem:[%s2 + $0x80] sm:$0xff]
  %v268 = vld [vmem:[%s2 + $0x88] sm:$0xff]
  %v269 = vld [vmem:[%s2 + $0x90] sm:$0xff]
  %v270 = vld [vmem:[%s2 + $0x98] sm:$0xff]
  %v271 = vld [vmem:[%s2 + $0xa0] sm:$0xff]
  %v272 = vld [vmem:[%s2 + $0xa8] sm:$0xff]
  %v273 = vld [vmem:[%s2 + $0xb0] sm:$0xff]
  %v274 = vld [vmem:[%s2 + $0xb8] sm:$0xff]
  %v275 = vld [vmem:[%s2 + $0xc0] sm:$0xff]
  %v276 = vld [vmem:[%s2 + $0xc8] sm:$0xff]
  %v277 = vld [vmem:[%s2 + $0xd0] sm:$0xff]
  %v278 = vld [vmem:[%s2 + $0xd8] sm:$0xff]
  %v279 = vld [vmem:[%s2 + $0xe0] sm:$0xff]
  %v280 = vld [vmem:[%s2 + $0xe8] sm:$0xff]
  %v281 = vld [vmem:[%s2 + $0xf0] sm:$0xff]
  %v282 = vld [vmem:[%s2 + $0xf8] sm:$0xff]
  %v315 = vunpack.c.l.b16 %v251
  %v316 = vunpack.c.h.b16 %v251
  %v317 = vunpack.c.l.b16 %v252
  %v318 = vunpack.c.h.b16 %v252
  %v319 = vunpack.c.l.b16 %v253
  %v320 = vunpack.c.h.b16 %v253
  %v321 = vunpack.c.l.b16 %v254
  %v322 = vunpack.c.h.b16 %v254
  %v323 = vunpack.c.l.b16 %v255
  %v324 = vunpack.c.h.b16 %v255
  %v325 = vunpack.c.l.b16 %v256
  %v326 = vunpack.c.h.b16 %v256
  %v327 = vunpack.c.l.b16 %v257
  %v328 = vunpack.c.h.b16 %v257
  %v329 = vunpack.c.l.b16 %v258
  %v330 = vunpack.c.h.b16 %v258
  %v331 = vunpack.c.l.b16 %v259
  %v332 = vunpack.c.h.b16 %v259
  %v333 = vunpack.c.l.b16 %v260
  %v334 = vunpack.c.h.b16 %v260
  %v335 = vunpack.c.l.b16 %v261
  %v336 = vunpack.c.h.b16 %v261
  %v337 = vunpack.c.l.b16 %v262
  %v338 = vunpack.c.h.b16 %v262
  %v339 = vunpack.c.l.b16 %v263
  %v340 = vunpack.c.h.b16 %v263
  %v341 = vunpack.c.l.b16 %v264
  %v342 = vunpack.c.h.b16 %v264
  %v343 = vunpack.c.l.b16 %v265
  %v344 = vunpack.c.h.b16 %v265
  %v345 = vunpack.c.l.b16 %v266
  %v346 = vunpack.c.h.b16 %v266
  %v347 = vunpack.c.l.b16 %v267
  %v348 = vunpack.c.h.b16 %v267
  %v349 = vunpack.c.l.b16 %v268
  %v350 = vunpack.c.h.b16 %v268
  %v351 = vunpack.c.l.b16 %v269
  %v352 = vunpack.c.h.b16 %v269
  %v353 = vunpack.c.l.b16 %v270
  %v354 = vunpack.c.h.b16 %v270
  %v355 = vunpack.c.l.b16 %v271
  %v356 = vunpack.c.h.b16 %v271
  %v357 = vunpack.c.l.b16 %v272
  %v358 = vunpack.c.h.b16 %v272
  %v359 = vunpack.c.l.b16 %v273
  %v360 = vunpack.c.h.b16 %v273
  %v361 = vunpack.c.l.b16 %v274
  %v362 = vunpack.c.h.b16 %v274
  %v363 = vunpack.c.l.b16 %v275
  %v364 = vunpack.c.h.b16 %v275
  %v365 = vunpack.c.l.b16 %v276
  %v366 = vunpack.c.h.b16 %v276
  %v367 = vunpack.c.l.b16 %v277
  %v368 = vunpack.c.h.b16 %v277
  %v369 = vunpack.c.l.b16 %v278
  %v370 = vunpack.c.h.b16 %v278
  %v371 = vunpack.c.l.b16 %v279
  %v372 = vunpack.c.h.b16 %v279
  %v373 = vunpack.c.l.b16 %v280
  %v374 = vunpack.c.h.b16 %v280
  %v375 = vunpack.c.l.b16 %v281
  %v376 = vunpack.c.h.b16 %v281
  %v377 = vunpack.c.l.b16 %v282
  %v378 = vunpack.c.h.b16 %v282
  %v379 = vpack.c.b16 %v319, %v315
  %v380 = vpack.c.b16 %v320, %v316
  %v381 = vpack.c.b16 %v321, %v317
  %v382 = vpack.c.b16 %v322, %v318
  %v383 = vpack.c.b16 %v327, %v323
  %v384 = vpack.c.b16 %v328, %v324
  %v385 = vpack.c.b16 %v329, %v325
  %v386 = vpack.c.b16 %v330, %v326
  %v387 = vpack.c.b16 %v335, %v331
  %v388 = vpack.c.b16 %v336, %v332
  %v389 = vpack.c.b16 %v337, %v333
  %v390 = vpack.c.b16 %v338, %v334
  %v391 = vpack.c.b16 %v343, %v339
  %v392 = vpack.c.b16 %v344, %v340
  %v393 = vpack.c.b16 %v345, %v341
  %v394 = vpack.c.b16 %v346, %v342
  %v395 = vpack.c.b16 %v351, %v347
  %v396 = vpack.c.b16 %v352, %v348
  %v397 = vpack.c.b16 %v353, %v349
  %v398 = vpack.c.b16 %v354, %v350
  %v399 = vpack.c.b16 %v359, %v355
  %v400 = vpack.c.b16 %v360, %v356
  %v401 = vpack.c.b16 %v361, %v357
  %v402 = vpack.c.b16 %v362, %v358
  %v403 = vpack.c.b16 %v367, %v363
  %v404 = vpack.c.b16 %v368, %v364
  %v405 = vpack.c.b16 %v369, %v365
  %v406 = vpack.c.b16 %v370, %v366
  %v407 = vpack.c.b16 %v375, %v371
  %v408 = vpack.c.b16 %v376, %v372
  %v409 = vpack.c.b16 %v377, %v373
  %v410 = vpack.c.b16 %v378, %v374
  %443 = vmatpush.bf16.msra.mxu0 %v407
  %444 = vmatpush.bf16.msra.mxu0 %v403
  %445 = vmatpush.bf16.msra.mxu0 %v399
  %446 = vmatpush.bf16.msra.mxu0 %v395
  %447 = vmatpush.bf16.msra.mxu0 %v391
  %448 = vmatpush.bf16.msra.mxu0 %v387
  %449 = vmatpush.bf16.msra.mxu0 %v383
  %450 = vmatpush.bf16.msra.mxu0 %v379
  %451 = vmatmul.bf16.gmra.mxu0 0
  %v452 = vpop.f32.mrf.mxu0
  %v453 = vadd.f32 0.0, %v452
  %v454 = vpop.f32.mrf.mxu0
  %455 = vdwg.mxu0
  %456 = vmatpush.bf16.msra.mxu0 %v408
  %457 = vmatpush.bf16.msra.mxu0 %v404
  %458 = vmatpush.bf16.msra.mxu0 %v400
  %459 = vmatpush.bf16.msra.mxu0 %v396
  %460 = vmatpush.bf16.msra.mxu0 %v392
  %461 = vmatpush.bf16.msra.mxu0 %v388
  %462 = vmatpush.bf16.msra.mxu0 %v384
  %463 = vmatpush.bf16.msra.mxu0 %v380
  %464 = vmatmul.bf16.gmra.mxu0 0
  %v465 = vpop.f32.mrf.mxu0
  %v466 = vadd.f32 0.0, %v465
  %v467 = vpop.f32.mrf.mxu0
  %468 = vdwg.mxu0
  %469 = vmatpush.bf16.msra.mxu0 %v409
  %470 = vmatpush.bf16.msra.mxu0 %v405
  %471 = vmatpush.bf16.msra.mxu0 %v401
  %472 = vmatpush.bf16.msra.mxu0 %v397
  %473 = vmatpush.bf16.msra.mxu0 %v393
  %474 = vmatpush.bf16.msra.mxu0 %v389
  %475 = vmatpush.bf16.msra.mxu0 %v385
  %476 = vmatpush.bf16.msra.mxu0 %v381
  %477 = vmatmul.bf16.gmra.mxu0 0
  %v478 = vpop.f32.mrf.mxu0
  %v479 = vadd.f32 0.0, %v478
  %v480 = vpop.f32.mrf.mxu0
  %481 = vdwg.mxu0
  %482 = vmatpush.bf16.msra.mxu0 %v410
  %483 = vmatpush.bf16.msra.mxu0 %v406
  %484 = vmatpush.bf16.msra.mxu0 %v402
  %485 = vmatpush.bf16.msra.mxu0 %v398
  %486 = vmatpush.bf16.msra.mxu0 %v394
  %487 = vmatpush.bf16.msra.mxu0 %v390
  %488 = vmatpush.bf16.msra.mxu0 %v386
  %489 = vmatpush.bf16.msra.mxu0 %v382
  %490 = vmatmul.bf16.gmra.mxu0 0
  %v491 = vpop.f32.mrf.mxu0
  %v492 = vadd.f32 0.0, %v491
  %v493 = vpop.f32.mrf.mxu0
  %494 = vdwg.mxu0
  %v495 = vadd.f32 %v247, %v453
  %v496 = vadd.f32 %v248, %v466
  %v497 = vadd.f32 %v249, %v479
  %v498 = vadd.f32 %v250, %v492
  %v499 = vxor.u32 %v495, 2147483648
  %v500 = vmul.f32 %v499, 1.442695
  %v501 = vpow.pop %v500
  %v502 = vadd.f32 %v501, 1.0
  %v503 = vrcp.pop %v502
  %v504 = vmul.f32 %v502, %v503
  %v505 = vsub.f32 1.0, %v504
  %v506 = vmul.f32 %v503, %v505
  %v507 = vadd.f32 %v503, %v506
  %vm508 = vweird.f32 %v502
  %vm509 = vweird.f32 %v503
  %vm510 = vmor %vm508, %vm509
  %v511 = vsel %vm510, %v503, %v507
  %v512 = vand.u32 2147483647, %v502
  %vm513 = vcmp.eq.f32.partialorder %v512, 8.507059e+37
  %v514 = vand.u32 %v502, 2147483648
  %v515 = vor.u32 1.1754944e-38, %v514
  %v516 = vsel %vm513, %v515, %v511
  %v517 = vmul.f32 1.0, %v516
  %v518 = vxor.u32 %v496, 2147483648
  %v519 = vmul.f32 %v518, 1.442695
  %v520 = vpow.pop %v519
  %v521 = vadd.f32 %v520, 1.0
  %v522 = vrcp.pop %v521
  %v523 = vmul.f32 %v521, %v522
  %v524 = vsub.f32 1.0, %v523
  %v525 = vmul.f32 %v522, %v524
  %v526 = vadd.f32 %v522, %v525
  %vm527 = vweird.f32 %v521
  %vm528 = vweird.f32 %v522
  %vm529 = vmor %vm527, %vm528
  %v530 = vsel %vm529, %v522, %v526
  %v531 = vand.u32 2147483647, %v521
  %vm532 = vcmp.eq.f32.partialorder %v531, 8.507059e+37
  %v533 = vand.u32 %v521, 2147483648
  %v534 = vor.u32 1.1754944e-38, %v533
  %v535 = vsel %vm532, %v534, %v530
  %v536 = vmul.f32 1.0, %v535
  %v537 = vtanh.pop %v497
  %v538 = vxor.u32 %v498, 2147483648
  %v539 = vmul.f32 %v538, 1.442695
  %v540 = vpow.pop %v539
  %v541 = vadd.f32 %v540, 1.0
  %v542 = vrcp.pop %v541
  %v543 = vmul.f32 %v541, %v542
  %v544 = vsub.f32 1.0, %v543
  %v545 = vmul.f32 %v542, %v544
  %v546 = vadd.f32 %v542, %v545
  %vm547 = vweird.f32 %v541
  %vm548 = vweird.f32 %v542
  %vm549 = vmor %vm547, %vm548
  %v550 = vsel %vm549, %v542, %v546
  %v551 = vand.u32 2147483647, %v541
  %vm552 = vcmp.eq.f32.partialorder %v551, 8.507059e+37
  %v553 = vand.u32 %v541, 2147483648
  %v554 = vor.u32 1.1754944e-38, %v553
  %v555 = vsel %vm552, %v554, %v550
  %v556 = vmul.f32 1.0, %v555
  %v557 = vmul.f32 %v536, 0.0
  %v558 = vmul.f32 %v517, %v537
  %v559 = vadd.f32 %v557, %v558
  %v560 = vtanh.pop %v559
  %v561 = vmul.f32 %v556, %v560
  %v562 = vld [vmem:[#allocation2 + $0x20] sm:$0xff]
  %v563 = vld [vmem:[#allocation2 + $0x28] sm:$0xff]
  %v564 = vld [vmem:[#allocation2 + $0x30] sm:$0xff]
  %v565 = vld [vmem:[#allocation2 + $0x38] sm:$0xff]
  %v566 = vpack.c.bf16 %v561, %v561
  %567 = vmatpush.bf16.msra.mxu0 %v407
  %568 = vmatpush.bf16.msra.mxu0 %v403
  %569 = vmatpush.bf16.msra.mxu0 %v399
  %570 = vmatpush.bf16.msra.mxu0 %v395
  %571 = vmatpush.bf16.msra.mxu0 %v391
  %572 = vmatpush.bf16.msra.mxu0 %v387
  %573 = vmatpush.bf16.msra.mxu0 %v383
  %574 = vmatpush.bf16.msra.mxu0 %v379
  %575 = vmatmul.bf16.gmra.mxu0 %v566
  %v576 = vpop.f32.mrf.mxu0
  %v577 = vadd.f32 0.0, %v576
  %v578 = vpop.f32.mrf.mxu0
  %579 = vdwg.mxu0
  %580 = vmatpush.bf16.msra.mxu0 %v408
  %581 = vmatpush.bf16.msra.mxu0 %v404
  %582 = vmatpush.bf16.msra.mxu0 %v400
  %583 = vmatpush.bf16.msra.mxu0 %v396
  %584 = vmatpush.bf16.msra.mxu0 %v392
  %585 = vmatpush.bf16.msra.mxu0 %v388
  %586 = vmatpush.bf16.msra.mxu0 %v384
  %587 = vmatpush.bf16.msra.mxu0 %v380
  %588 = vmatmul.bf16.gmra.mxu0 %v566
  %v589 = vpop.f32.mrf.mxu0
  %v590 = vadd.f32 0.0, %v589
  %v591 = vpop.f32.mrf.mxu0
  %592 = vdwg.mxu0
  %593 = vmatpush.bf16.msra.mxu0 %v409
  %594 = vmatpush.bf16.msra.mxu0 %v405
  %595 = vmatpush.bf16.msra.mxu0 %v401
  %596 = vmatpush.bf16.msra.mxu0 %v397
  %597 = vmatpush.bf16.msra.mxu0 %v393
  %598 = vmatpush.bf16.msra.mxu0 %v389
  %599 = vmatpush.bf16.msra.mxu0 %v385
  %600 = vmatpush.bf16.msra.mxu0 %v381
  %601 = vmatmul.bf16.gmra.mxu0 %v566
  %v602 = vpop.f32.mrf.mxu0
  %v603 = vadd.f32 0.0, %v602
  %v604 = vpop.f32.mrf.mxu0
  %605 = vdwg.mxu0
  %606 = vmatpush.bf16.msra.mxu0 %v410
  %607 = vmatpush.bf16.msra.mxu0 %v406
  %608 = vmatpush.bf16.msra.mxu0 %v402
  %609 = vmatpush.bf16.msra.mxu0 %v398
  %610 = vmatpush.bf16.msra.mxu0 %v394
  %611 = vmatpush.bf16.msra.mxu0 %v390
  %612 = vmatpush.bf16.msra.mxu0 %v386
  %613 = vmatpush.bf16.msra.mxu0 %v382
  %614 = vmatmul.bf16.gmra.mxu0 %v566
  %v615 = vpop.f32.mrf.mxu0
  %v616 = vadd.f32 0.0, %v615
  %v617 = vpop.f32.mrf.mxu0
  %618 = vdwg.mxu0
  %v619 = vadd.f32 %v562, %v577
  %v620 = vadd.f32 %v563, %v590
  %v621 = vadd.f32 %v564, %v603
  %v622 = vadd.f32 %v565, %v616
  %v623 = vxor.u32 %v619, 2147483648
  %v624 = vmul.f32 %v623, 1.442695
  %v625 = vpow.pop %v624
  %v626 = vadd.f32 %v625, 1.0
  %v627 = vrcp.pop %v626
  %v628 = vmul.f32 %v626, %v627
  %v629 = vsub.f32 1.0, %v628
  %v630 = vmul.f32 %v627, %v629
  %v631 = vadd.f32 %v627, %v630
  %vm632 = vweird.f32 %v626
  %vm633 = vweird.f32 %v627
  %vm634 = vmor %vm632, %vm633
  %v635 = vsel %vm634, %v627, %v631
  %v636 = vand.u32 2147483647, %v626
  %vm637 = vcmp.eq.f32.partialorder %v636, 8.507059e+37
  %v638 = vand.u32 %v626, 2147483648
  %v639 = vor.u32 1.1754944e-38, %v638
  %v640 = vsel %vm637, %v639, %v635
  %v641 = vmul.f32 1.0, %v640
  %v642 = vxor.u32 %v620, 2147483648
  %v643 = vmul.f32 %v642, 1.442695
  %v644 = vpow.pop %v643
  %v645 = vadd.f32 %v644, 1.0
  %v646 = vrcp.pop %v645
  %v647 = vmul.f32 %v645, %v646
  %v648 = vsub.f32 1.0, %v647
  %v649 = vmul.f32 %v646, %v648
  %v650 = vadd.f32 %v646, %v649
  %vm651 = vweird.f32 %v645
  %vm652 = vweird.f32 %v646
  %vm653 = vmor %vm651, %vm652
  %v654 = vsel %vm653, %v646, %v650
  %v655 = vand.u32 2147483647, %v645
  %vm656 = vcmp.eq.f32.partialorder %v655, 8.507059e+37
  %v657 = vand.u32 %v645, 2147483648
  %v658 = vor.u32 1.1754944e-38, %v657
  %v659 = vsel %vm656, %v658, %v654
  %v660 = vmul.f32 1.0, %v659
  %v661 = vtanh.pop %v621
  %v662 = vxor.u32 %v622, 2147483648
  %v663 = vmul.f32 %v662, 1.442695
  %v664 = vpow.pop %v663
  %v665 = vadd.f32 %v664, 1.0
  %v666 = vrcp.pop %v665
  %v667 = vmul.f32 %v665, %v666
  %v668 = vsub.f32 1.0, %v667
  %v669 = vmul.f32 %v666, %v668
  %v670 = vadd.f32 %v666, %v669
  %vm671 = vweird.f32 %v665
  %vm672 = vweird.f32 %v666
  %vm673 = vmor %vm671, %vm672
  %v674 = vsel %vm673, %v666, %v670
  %v675 = vand.u32 2147483647, %v665
  %vm676 = vcmp.eq.f32.partialorder %v675, 8.507059e+37
  %v677 = vand.u32 %v665, 2147483648
  %v678 = vor.u32 1.1754944e-38, %v677
  %v679 = vsel %vm676, %v678, %v674
  %v680 = vmul.f32 1.0, %v679
  %v681 = vmul.f32 %v660, %v559
  %v682 = vmul.f32 %v641, %v661
  %v683 = vadd.f32 %v681, %v682
  %v684 = vtanh.pop %v683
  %v685 = vmul.f32 %v680, %v684
  %v686 = vld [vmem:[#allocation2 + $0x40] sm:$0xff]
  %v687 = vld [vmem:[#allocation2 + $0x48] sm:$0xff]
  %v688 = vld [vmem:[#allocation2 + $0x50] sm:$0xff]
  %v689 = vld [vmem:[#allocation2 + $0x58] sm:$0xff]
  %v690 = vpack.c.bf16 %v685, %v685
  %691 = vmatpush.bf16.msra.mxu0 %v407
  %692 = vmatpush.bf16.msra.mxu0 %v403
  %693 = vmatpush.bf16.msra.mxu0 %v399
  %694 = vmatpush.bf16.msra.mxu0 %v395
  %695 = vmatpush.bf16.msra.mxu0 %v391
  %696 = vmatpush.bf16.msra.mxu0 %v387
  %697 = vmatpush.bf16.msra.mxu0 %v383
  %698 = vmatpush.bf16.msra.mxu0 %v379
  %699 = vmatmul.bf16.gmra.mxu0 %v690
  %v700 = vpop.f32.mrf.mxu0
  %v701 = vadd.f32 0.0, %v700
  %v702 = vpop.f32.mrf.mxu0
  %703 = vdwg.mxu0
  %704 = vmatpush.bf16.msra.mxu0 %v408
  %705 = vmatpush.bf16.msra.mxu0 %v404
  %706 = vmatpush.bf16.msra.mxu0 %v400
  %707 = vmatpush.bf16.msra.mxu0 %v396
  %708 = vmatpush.bf16.msra.mxu0 %v392
  %709 = vmatpush.bf16.msra.mxu0 %v388
  %710 = vmatpush.bf16.msra.mxu0 %v384
  %711 = vmatpush.bf16.msra.mxu0 %v380
  %712 = vmatmul.bf16.gmra.mxu0 %v690
  %v713 = vpop.f32.mrf.mxu0
  %v714 = vadd.f32 0.0, %v713
  %v715 = vpop.f32.mrf.mxu0
  %716 = vdwg.mxu0
  %717 = vmatpush.bf16.msra.mxu0 %v409
  %718 = vmatpush.bf16.msra.mxu0 %v405
  %719 = vmatpush.bf16.msra.mxu0 %v401
  %720 = vmatpush.bf16.msra.mxu0 %v397
  %721 = vmatpush.bf16.msra.mxu0 %v393
  %722 = vmatpush.bf16.msra.mxu0 %v389
  %723 = vmatpush.bf16.msra.mxu0 %v385
  %724 = vmatpush.bf16.msra.mxu0 %v381
  %725 = vmatmul.bf16.gmra.mxu0 %v690
  %v726 = vpop.f32.mrf.mxu0
  %v727 = vadd.f32 0.0, %v726
  %v728 = vpop.f32.mrf.mxu0
  %729 = vdwg.mxu0
  %730 = vmatpush.bf16.msra.mxu0 %v410
  %731 = vmatpush.bf16.msra.mxu0 %v406
  %732 = vmatpush.bf16.msra.mxu0 %v402
  %733 = vmatpush.bf16.msra.mxu0 %v398
  %734 = vmatpush.bf16.msra.mxu0 %v394
  %735 = vmatpush.bf16.msra.mxu0 %v390
  %736 = vmatpush.bf16.msra.mxu0 %v386
  %737 = vmatpush.bf16.msra.mxu0 %v382
  %738 = vmatmul.bf16.gmra.mxu0 %v690
  %v739 = vpop.f32.mrf.mxu0
  %v740 = vadd.f32 0.0, %v739
  %v741 = vpop.f32.mrf.mxu0
  %742 = vdwg.mxu0
  %v743 = vadd.f32 %v686, %v701
  %v744 = vadd.f32 %v687, %v714
  %v745 = vadd.f32 %v688, %v727
  %v746 = vadd.f32 %v689, %v740
  %v747 = vxor.u32 %v743, 2147483648
  %v748 = vmul.f32 %v747, 1.442695
  %v749 = vpow.pop %v748
  %v750 = vadd.f32 %v749, 1.0
  %v751 = vrcp.pop %v750
  %v752 = vmul.f32 %v750, %v751
  %v753 = vsub.f32 1.0, %v752
  %v754 = vmul.f32 %v751, %v753
  %v755 = vadd.f32 %v751, %v754
  %vm756 = vweird.f32 %v750
  %vm757 = vweird.f32 %v751
  %vm758 = vmor %vm756, %vm757
  %v759 = vsel %vm758, %v751, %v755
  %v760 = vand.u32 2147483647, %v750
  %vm761 = vcmp.eq.f32.partialorder %v760, 8.507059e+37
  %v762 = vand.u32 %v750, 2147483648
  %v763 = vor.u32 1.1754944e-38, %v762
  %v764 = vsel %vm761, %v763, %v759
  %v765 = vmul.f32 1.0, %v764
  %v766 = vxor.u32 %v744, 2147483648
  %v767 = vmul.f32 %v766, 1.442695
  %v768 = vpow.pop %v767
  %v769 = vadd.f32 %v768, 1.0
  %v770 = vrcp.pop %v769
  %v771 = vmul.f32 %v769, %v770
  %v772 = vsub.f32 1.0, %v771
  %v773 = vmul.f32 %v770, %v772
  %v774 = vadd.f32 %v770, %v773
  %vm775 = vweird.f32 %v769
  %vm776 = vweird.f32 %v770
  %vm777 = vmor %vm775, %vm776
  %v778 = vsel %vm777, %v770, %v774
  %v779 = vand.u32 2147483647, %v769
  %vm780 = vcmp.eq.f32.partialorder %v779, 8.507059e+37
  %v781 = vand.u32 %v769, 2147483648
  %v782 = vor.u32 1.1754944e-38, %v781
  %v783 = vsel %vm780, %v782, %v778
  %v784 = vmul.f32 1.0, %v783
  %v785 = vtanh.pop %v745
  %v786 = vxor.u32 %v746, 2147483648
  %v787 = vmul.f32 %v786, 1.442695
  %v788 = vpow.pop %v787
  %v789 = vadd.f32 %v788, 1.0
  %v790 = vrcp.pop %v789
  %v791 = vmul.f32 %v789, %v790
  %v792 = vsub.f32 1.0, %v791
  %v793 = vmul.f32 %v790, %v792
  %v794 = vadd.f32 %v790, %v793
  %vm795 = vweird.f32 %v789
  %vm796 = vweird.f32 %v790
  %vm797 = vmor %vm795, %vm796
  %v798 = vsel %vm797, %v790, %v794
  %v799 = vand.u32 2147483647, %v789
  %vm800 = vcmp.eq.f32.partialorder %v799, 8.507059e+37
  %v801 = vand.u32 %v789, 2147483648
  %v802 = vor.u32 1.1754944e-38, %v801
  %v803 = vsel %vm800, %v802, %v798
  %v804 = vmul.f32 1.0, %v803
  %v805 = vmul.f32 %v784, %v683
  %v806 = vmul.f32 %v765, %v785
  %v807 = vadd.f32 %v805, %v806
  %v808 = vtanh.pop %v807
  %v809 = vmul.f32 %v804, %v808
  %v810 = vld [vmem:[#allocation2 + $0x60] sm:$0xff]
  %v811 = vld [vmem:[#allocation2 + $0x68] sm:$0xff]
  %v812 = vld [vmem:[#allocation2 + $0x70] sm:$0xff]
  %v813 = vld [vmem:[#allocation2 + $0x78] sm:$0xff]
  %v814 = vpack.c.bf16 %v809, %v809
  %815 = vmatpush.bf16.msra.mxu0 %v407
  %816 = vmatpush.bf16.msra.mxu0 %v403
  %817 = vmatpush.bf16.msra.mxu0 %v399
  %818 = vmatpush.bf16.msra.mxu0 %v395
  %819 = vmatpush.bf16.msra.mxu0 %v391
  %820 = vmatpush.bf16.msra.mxu0 %v387
  %821 = vmatpush.bf16.msra.mxu0 %v383
  %822 = vmatpush.bf16.msra.mxu0 %v379
  %823 = vmatmul.bf16.gmra.mxu0 %v814
  %v824 = vpop.f32.mrf.mxu0
  %v825 = vadd.f32 0.0, %v824
  %v826 = vpop.f32.mrf.mxu0
  %827 = vdwg.mxu0
  %828 = vmatpush.bf16.msra.mxu0 %v408
  %829 = vmatpush.bf16.msra.mxu0 %v404
  %830 = vmatpush.bf16.msra.mxu0 %v400
  %831 = vmatpush.bf16.msra.mxu0 %v396
  %832 = vmatpush.bf16.msra.mxu0 %v392
  %833 = vmatpush.bf16.msra.mxu0 %v388
  %834 = vmatpush.bf16.msra.mxu0 %v384
  %835 = vmatpush.bf16.msra.mxu0 %v380
  %836 = vmatmul.bf16.gmra.mxu0 %v814
  %v837 = vpop.f32.mrf.mxu0
  %v838 = vadd.f32 0.0, %v837
  %v839 = vpop.f32.mrf.mxu0
  %840 = vdwg.mxu0
  %841 = vmatpush.bf16.msra.mxu0 %v409
  %842 = vmatpush.bf16.msra.mxu0 %v405
  %843 = vmatpush.bf16.msra.mxu0 %v401
  %844 = vmatpush.bf16.msra.mxu0 %v397
  %845 = vmatpush.bf16.msra.mxu0 %v393
  %846 = vmatpush.bf16.msra.mxu0 %v389
  %847 = vmatpush.bf16.msra.mxu0 %v385
  %848 = vmatpush.bf16.msra.mxu0 %v381
  %849 = vmatmul.bf16.gmra.mxu0 %v814
  %v850 = vpop.f32.mrf.mxu0
  %v851 = vadd.f32 0.0, %v850
  %v852 = vpop.f32.mrf.mxu0
  %853 = vdwg.mxu0
  %854 = vmatpush.bf16.msra.mxu0 %v410
  %855 = vmatpush.bf16.msra.mxu0 %v406
  %856 = vmatpush.bf16.msra.mxu0 %v402
  %857 = vmatpush.bf16.msra.mxu0 %v398
  %858 = vmatpush.bf16.msra.mxu0 %v394
  %859 = vmatpush.bf16.msra.mxu0 %v390
  %860 = vmatpush.bf16.msra.mxu0 %v386
  %861 = vmatpush.bf16.msra.mxu0 %v382
  %862 = vmatmul.bf16.gmra.mxu0 %v814
  %v863 = vpop.f32.mrf.mxu0
  %v864 = vadd.f32 0.0, %v863
  %v865 = vpop.f32.mrf.mxu0
  %866 = vdwg.mxu0
  %v867 = vadd.f32 %v810, %v825
  %v868 = vadd.f32 %v811, %v838
  %v869 = vadd.f32 %v812, %v851
  %v870 = vadd.f32 %v813, %v864
  %v871 = vxor.u32 %v867, 2147483648
  %v872 = vmul.f32 %v871, 1.442695
  %v873 = vpow.pop %v872
  %v874 = vadd.f32 %v873, 1.0
  %v875 = vrcp.pop %v874
  %v876 = vmul.f32 %v874, %v875
  %v877 = vsub.f32 1.0, %v876
  %v878 = vmul.f32 %v875, %v877
  %v879 = vadd.f32 %v875, %v878
  %vm880 = vweird.f32 %v874
  %vm881 = vweird.f32 %v875
  %vm882 = vmor %vm880, %vm881
  %v883 = vsel %vm882, %v875, %v879
  %v884 = vand.u32 2147483647, %v874
  %vm885 = vcmp.eq.f32.partialorder %v884, 8.507059e+37
  %v886 = vand.u32 %v874, 2147483648
  %v887 = vor.u32 1.1754944e-38, %v886
  %v888 = vsel %vm885, %v887, %v883
  %v889 = vmul.f32 1.0, %v888
  %v890 = vxor.u32 %v868, 2147483648
  %v891 = vmul.f32 %v890, 1.442695
  %v892 = vpow.pop %v891
  %v893 = vadd.f32 %v892, 1.0
  %v894 = vrcp.pop %v893
  %v895 = vmul.f32 %v893, %v894
  %v896 = vsub.f32 1.0, %v895
  %v897 = vmul.f32 %v894, %v896
  %v898 = vadd.f32 %v894, %v897
  %vm899 = vweird.f32 %v893
  %vm900 = vweird.f32 %v894
  %vm901 = vmor %vm899, %vm900
  %v902 = vsel %vm901, %v894, %v898
  %v903 = vand.u32 2147483647, %v893
  %vm904 = vcmp.eq.f32.partialorder %v903, 8.507059e+37
  %v905 = vand.u32 %v893, 2147483648
  %v906 = vor.u32 1.1754944e-38, %v905
  %v907 = vsel %vm904, %v906, %v902
  %v908 = vmul.f32 1.0, %v907
  %v909 = vtanh.pop %v869
  %v910 = vxor.u32 %v870, 2147483648
  %v911 = vmul.f32 %v910, 1.442695
  %v912 = vpow.pop %v911
  %v913 = vadd.f32 %v912, 1.0
  %v914 = vrcp.pop %v913
  %v915 = vmul.f32 %v913, %v914
  %v916 = vsub.f32 1.0, %v915
  %v917 = vmul.f32 %v914, %v916
  %v918 = vadd.f32 %v914, %v917
  %vm919 = vweird.f32 %v913
  %vm920 = vweird.f32 %v914
  %vm921 = vmor %vm919, %vm920
  %v922 = vsel %vm921, %v914, %v918
  %v923 = vand.u32 2147483647, %v913
  %vm924 = vcmp.eq.f32.partialorder %v923, 8.507059e+37
  %v925 = vand.u32 %v913, 2147483648
  %v926 = vor.u32 1.1754944e-38, %v925
  %v927 = vsel %vm924, %v926, %v922
  %v928 = vmul.f32 1.0, %v927
  %v929 = vmul.f32 %v908, %v807
  %v930 = vmul.f32 %v889, %v909
  %v931 = vadd.f32 %v929, %v930
  %v932 = vtanh.pop %v931
  %v933 = vmul.f32 %v928, %v932
  %v934 = vld [vmem:[#allocation2 + $0x80] sm:$0xff]
  %v935 = vld [vmem:[#allocation2 + $0x88] sm:$0xff]
  %v936 = vld [vmem:[#allocation2 + $0x90] sm:$0xff]
  %v937 = vld [vmem:[#allocation2 + $0x98] sm:$0xff]
  %v938 = vpack.c.bf16 %v933, %v933
  %939 = vmatpush.bf16.msra.mxu0 %v407
  %940 = vmatpush.bf16.msra.mxu0 %v403
  %941 = vmatpush.bf16.msra.mxu0 %v399
  %942 = vmatpush.bf16.msra.mxu0 %v395
  %943 = vmatpush.bf16.msra.mxu0 %v391
  %944 = vmatpush.bf16.msra.mxu0 %v387
  %945 = vmatpush.bf16.msra.mxu0 %v383
  %946 = vmatpush.bf16.msra.mxu0 %v379
  %947 = vmatmul.bf16.gmra.mxu0 %v938
  %v948 = vpop.f32.mrf.mxu0
  %v949 = vadd.f32 0.0, %v948
  %v950 = vpop.f32.mrf.mxu0
  %951 = vdwg.mxu0
  %952 = vmatpush.bf16.msra.mxu0 %v408
  %953 = vmatpush.bf16.msra.mxu0 %v404
  %954 = vmatpush.bf16.msra.mxu0 %v400
  %955 = vmatpush.bf16.msra.mxu0 %v396
  %956 = vmatpush.bf16.msra.mxu0 %v392
  %957 = vmatpush.bf16.msra.mxu0 %v388
  %958 = vmatpush.bf16.msra.mxu0 %v384
  %959 = vmatpush.bf16.msra.mxu0 %v380
  %960 = vmatmul.bf16.gmra.mxu0 %v938
  %v961 = vpop.f32.mrf.mxu0
  %v962 = vadd.f32 0.0, %v961
  %v963 = vpop.f32.mrf.mxu0
  %964 = vdwg.mxu0
  %965 = vmatpush.bf16.msra.mxu0 %v409
  %966 = vmatpush.bf16.msra.mxu0 %v405
  %967 = vmatpush.bf16.msra.mxu0 %v401
  %968 = vmatpush.bf16.msra.mxu0 %v397
  %969 = vmatpush.bf16.msra.mxu0 %v393
  %970 = vmatpush.bf16.msra.mxu0 %v389
  %971 = vmatpush.bf16.msra.mxu0 %v385
  %972 = vmatpush.bf16.msra.mxu0 %v381
  %973 = vmatmul.bf16.gmra.mxu0 %v938
  %v974 = vpop.f32.mrf.mxu0
  %v975 = vadd.f32 0.0, %v974
  %v976 = vpop.f32.mrf.mxu0
  %977 = vdwg.mxu0
  %978 = vmatpush.bf16.msra.mxu0 %v410
  %979 = vmatpush.bf16.msra.mxu0 %v406
  %980 = vmatpush.bf16.msra.mxu0 %v402
  %981 = vmatpush.bf16.msra.mxu0 %v398
  %982 = vmatpush.bf16.msra.mxu0 %v394
  %983 = vmatpush.bf16.msra.mxu0 %v390
  %984 = vmatpush.bf16.msra.mxu0 %v386
  %985 = vmatpush.bf16.msra.mxu0 %v382
  %986 = vmatmul.bf16.gmra.mxu0 %v938
  %v987 = vpop.f32.mrf.mxu0
  %v988 = vadd.f32 0.0, %v987
  %v989 = vpop.f32.mrf.mxu0
  %990 = vdwg.mxu0
  %v991 = vadd.f32 %v934, %v949
  %v992 = vadd.f32 %v935, %v962
  %v993 = vadd.f32 %v936, %v975
  %v994 = vadd.f32 %v937, %v988
  %v995 = vxor.u32 %v991, 2147483648
  %v996 = vmul.f32 %v995, 1.442695
  %v997 = vpow.pop %v996
  %v998 = vadd.f32 %v997, 1.0
  %v999 = vrcp.pop %v998
  %v1000 = vmul.f32 %v998, %v999
  %v1001 = vsub.f32 1.0, %v1000
  %v1002 = vmul.f32 %v999, %v1001
  %v1003 = vadd.f32 %v999, %v1002
  %vm1004 = vweird.f32 %v998
  %vm1005 = vweird.f32 %v999
  %vm1006 = vmor %vm1004, %vm1005
  %v1007 = vsel %vm1006, %v999, %v1003
  %v1008 = vand.u32 2147483647, %v998
  %vm1009 = vcmp.eq.f32.partialorder %v1008, 8.507059e+37
  %v1010 = vand.u32 %v998, 2147483648
  %v1011 = vor.u32 1.1754944e-38, %v1010
  %v1012 = vsel %vm1009, %v1011, %v1007
  %v1013 = vmul.f32 1.0, %v1012
  %v1014 = vxor.u32 %v992, 2147483648
  %v1015 = vmul.f32 %v1014, 1.442695
  %v1016 = vpow.pop %v1015
  %v1017 = vadd.f32 %v1016, 1.0
  %v1018 = vrcp.pop %v1017
  %v1019 = vmul.f32 %v1017, %v1018
  %v1020 = vsub.f32 1.0, %v1019
  %v1021 = vmul.f32 %v1018, %v1020
  %v1022 = vadd.f32 %v1018, %v1021
  %vm1023 = vweird.f32 %v1017
  %vm1024 = vweird.f32 %v1018
  %vm1025 = vmor %vm1023, %vm1024
  %v1026 = vsel %vm1025, %v1018, %v1022
  %v1027 = vand.u32 2147483647, %v1017
  %vm1028 = vcmp.eq.f32.partialorder %v1027, 8.507059e+37
  %v1029 = vand.u32 %v1017, 2147483648
  %v1030 = vor.u32 1.1754944e-38, %v1029
  %v1031 = vsel %vm1028, %v1030, %v1026
  %v1032 = vmul.f32 1.0, %v1031
  %v1033 = vtanh.pop %v993
  %v1034 = vxor.u32 %v994, 2147483648
  %v1035 = vmul.f32 %v1034, 1.442695
  %v1036 = vpow.pop %v1035
  %v1037 = vadd.f32 %v1036, 1.0
  %v1038 = vrcp.pop %v1037
  %v1039 = vmul.f32 %v1037, %v1038
  %v1040 = vsub.f32 1.0, %v1039
  %v1041 = vmul.f32 %v1038, %v1040
  %v1042 = vadd.f32 %v1038, %v1041
  %vm1043 = vweird.f32 %v1037
  %vm1044 = vweird.f32 %v1038
  %vm1045 = vmor %vm1043, %vm1044
  %v1046 = vsel %vm1045, %v1038, %v1042
  %v1047 = vand.u32 2147483647, %v1037
  %vm1048 = vcmp.eq.f32.partialorder %v1047, 8.507059e+37
  %v1049 = vand.u32 %v1037, 2147483648
  %v1050 = vor.u32 1.1754944e-38, %v1049
  %v1051 = vsel %vm1048, %v1050, %v1046
  %v1052 = vmul.f32 1.0, %v1051
  %v1053 = vmul.f32 %v1032, %v931
  %v1054 = vmul.f32 %v1013, %v1033
  %v1055 = vadd.f32 %v1053, %v1054
  %v1056 = vtanh.pop %v1055
  %v1057 = vmul.f32 %v1052, %v1056
  %v1058 = vld [vmem:[#allocation2 + $0xa0] sm:$0xff]
  %v1059 = vld [vmem:[#allocation2 + $0xa8] sm:$0xff]
  %v1060 = vld [vmem:[#allocation2 + $0xb0] sm:$0xff]
  %v1061 = vld [vmem:[#allocation2 + $0xb8] sm:$0xff]
  %v1062 = vpack.c.bf16 %v1057, %v1057
  %1063 = vmatpush.bf16.msra.mxu0 %v407
  %1064 = vmatpush.bf16.msra.mxu0 %v403
  %1065 = vmatpush.bf16.msra.mxu0 %v399
  %1066 = vmatpush.bf16.msra.mxu0 %v395
  %1067 = vmatpush.bf16.msra.mxu0 %v391
  %1068 = vmatpush.bf16.msra.mxu0 %v387
  %1069 = vmatpush.bf16.msra.mxu0 %v383
  %1070 = vmatpush.bf16.msra.mxu0 %v379
  %1071 = vmatmul.bf16.gmra.mxu0 %v1062
  %v1072 = vpop.f32.mrf.mxu0
  %v1073 = vadd.f32 0.0, %v1072
  %v1074 = vpop.f32.mrf.mxu0
  %1075 = vdwg.mxu0
  %1076 = vmatpush.bf16.msra.mxu0 %v408
  %1077 = vmatpush.bf16.msra.mxu0 %v404
  %1078 = vmatpush.bf16.msra.mxu0 %v400
  %1079 = vmatpush.bf16.msra.mxu0 %v396
  %1080 = vmatpush.bf16.msra.mxu0 %v392
  %1081 = vmatpush.bf16.msra.mxu0 %v388
  %1082 = vmatpush.bf16.msra.mxu0 %v384
  %1083 = vmatpush.bf16.msra.mxu0 %v380
  %1084 = vmatmul.bf16.gmra.mxu0 %v1062
  %v1085 = vpop.f32.mrf.mxu0
  %v1086 = vadd.f32 0.0, %v1085
  %v1087 = vpop.f32.mrf.mxu0
  %1088 = vdwg.mxu0
  %1089 = vmatpush.bf16.msra.mxu0 %v409
  %1090 = vmatpush.bf16.msra.mxu0 %v405
  %1091 = vmatpush.bf16.msra.mxu0 %v401
  %1092 = vmatpush.bf16.msra.mxu0 %v397
  %1093 = vmatpush.bf16.msra.mxu0 %v393
  %1094 = vmatpush.bf16.msra.mxu0 %v389
  %1095 = vmatpush.bf16.msra.mxu0 %v385
  %1096 = vmatpush.bf16.msra.mxu0 %v381
  %1097 = vmatmul.bf16.gmra.mxu0 %v1062
  %v1098 = vpop.f32.mrf.mxu0
  %v1099 = vadd.f32 0.0, %v1098
  %v1100 = vpop.f32.mrf.mxu0
  %1101 = vdwg.mxu0
  %1102 = vmatpush.bf16.msra.mxu0 %v410
  %1103 = vmatpush.bf16.msra.mxu0 %v406
  %1104 = vmatpush.bf16.msra.mxu0 %v402
  %1105 = vmatpush.bf16.msra.mxu0 %v398
  %1106 = vmatpush.bf16.msra.mxu0 %v394
  %1107 = vmatpush.bf16.msra.mxu0 %v390
  %1108 = vmatpush.bf16.msra.mxu0 %v386
  %1109 = vmatpush.bf16.msra.mxu0 %v382
  %1110 = vmatmul.bf16.gmra.mxu0 %v1062
  %v1111 = vpop.f32.mrf.mxu0
  %v1112 = vadd.f32 0.0, %v1111
  %v1113 = vpop.f32.mrf.mxu0
  %1114 = vdwg.mxu0
  %v1115 = vadd.f32 %v1058, %v1073
  %v1116 = vadd.f32 %v1059, %v1086
  %v1117 = vadd.f32 %v1060, %v1099
  %v1118 = vadd.f32 %v1061, %v1112
  %v1119 = vxor.u32 %v1115, 2147483648
  %v1120 = vmul.f32 %v1119, 1.442695
  %v1121 = vpow.pop %v1120
  %v1122 = vadd.f32 %v1121, 1.0
  %v1123 = vrcp.pop %v1122
  %v1124 = vmul.f32 %v1122, %v1123
  %v1125 = vsub.f32 1.0, %v1124
  %v1126 = vmul.f32 %v1123, %v1125
  %v1127 = vadd.f32 %v1123, %v1126
  %vm1128 = vweird.f32 %v1122
  %vm1129 = vweird.f32 %v1123
  %vm1130 = vmor %vm1128, %vm1129
  %v1131 = vsel %vm1130, %v1123, %v1127
  %v1132 = vand.u32 2147483647, %v1122
  %vm1133 = vcmp.eq.f32.partialorder %v1132, 8.507059e+37
  %v1134 = vand.u32 %v1122, 2147483648
  %v1135 = vor.u32 1.1754944e-38, %v1134
  %v1136 = vsel %vm1133, %v1135, %v1131
  %v1137 = vmul.f32 1.0, %v1136
  %v1138 = vxor.u32 %v1116, 2147483648
  %v1139 = vmul.f32 %v1138, 1.442695
  %v1140 = vpow.pop %v1139
  %v1141 = vadd.f32 %v1140, 1.0
  %v1142 = vrcp.pop %v1141
  %v1143 = vmul.f32 %v1141, %v1142
  %v1144 = vsub.f32 1.0, %v1143
  %v1145 = vmul.f32 %v1142, %v1144
  %v1146 = vadd.f32 %v1142, %v1145
  %vm1147 = vweird.f32 %v1141
  %vm1148 = vweird.f32 %v1142
  %vm1149 = vmor %vm1147, %vm1148
  %v1150 = vsel %vm1149, %v1142, %v1146
  %v1151 = vand.u32 2147483647, %v1141
  %vm1152 = vcmp.eq.f32.partialorder %v1151, 8.507059e+37
  %v1153 = vand.u32 %v1141, 2147483648
  %v1154 = vor.u32 1.1754944e-38, %v1153
  %v1155 = vsel %vm1152, %v1154, %v1150
  %v1156 = vmul.f32 1.0, %v1155
  %v1157 = vtanh.pop %v1117
  %v1158 = vxor.u32 %v1118, 2147483648
  %v1159 = vmul.f32 %v1158, 1.442695
  %v1160 = vpow.pop %v1159
  %v1161 = vadd.f32 %v1160, 1.0
  %v1162 = vrcp.pop %v1161
  %v1163 = vmul.f32 %v1161, %v1162
  %v1164 = vsub.f32 1.0, %v1163
  %v1165 = vmul.f32 %v1162, %v1164
  %v1166 = vadd.f32 %v1162, %v1165
  %vm1167 = vweird.f32 %v1161
  %vm1168 = vweird.f32 %v1162
  %vm1169 = vmor %vm1167, %vm1168
  %v1170 = vsel %vm1169, %v1162, %v1166
  %v1171 = vand.u32 2147483647, %v1161
  %vm1172 = vcmp.eq.f32.partialorder %v1171, 8.507059e+37
  %v1173 = vand.u32 %v1161, 2147483648
  %v1174 = vor.u32 1.1754944e-38, %v1173
  %v1175 = vsel %vm1172, %v1174, %v1170
  %v1176 = vmul.f32 1.0, %v1175
  %v1177 = vmul.f32 %v1156, %v1055
  %v1178 = vmul.f32 %v1137, %v1157
  %v1179 = vadd.f32 %v1177, %v1178
  %v1180 = vtanh.pop %v1179
  %v1181 = vmul.f32 %v1176, %v1180
  %v1182 = vld [vmem:[#allocation2 + $0xc0] sm:$0xff]
  %v1183 = vld [vmem:[#allocation2 + $0xc8] sm:$0xff]
  %v1184 = vld [vmem:[#allocation2 + $0xd0] sm:$0xff]
  %v1185 = vld [vmem:[#allocation2 + $0xd8] sm:$0xff]
  %v1186 = vpack.c.bf16 %v1181, %v1181
  %1187 = vmatpush.bf16.msra.mxu0 %v407
  %1188 = vmatpush.bf16.msra.mxu0 %v403
  %1189 = vmatpush.bf16.msra.mxu0 %v399
  %1190 = vmatpush.bf16.msra.mxu0 %v395
  %1191 = vmatpush.bf16.msra.mxu0 %v391
  %1192 = vmatpush.bf16.msra.mxu0 %v387
  %1193 = vmatpush.bf16.msra.mxu0 %v383
  %1194 = vmatpush.bf16.msra.mxu0 %v379
  %1195 = vmatmul.bf16.gmra.mxu0 %v1186
  %v1196 = vpop.f32.mrf.mxu0
  %v1197 = vadd.f32 0.0, %v1196
  %v1198 = vpop.f32.mrf.mxu0
  %1199 = vdwg.mxu0
  %1200 = vmatpush.bf16.msra.mxu0 %v408
  %1201 = vmatpush.bf16.msra.mxu0 %v404
  %1202 = vmatpush.bf16.msra.mxu0 %v400
  %1203 = vmatpush.bf16.msra.mxu0 %v396
  %1204 = vmatpush.bf16.msra.mxu0 %v392
  %1205 = vmatpush.bf16.msra.mxu0 %v388
  %1206 = vmatpush.bf16.msra.mxu0 %v384
  %1207 = vmatpush.bf16.msra.mxu0 %v380
  %1208 = vmatmul.bf16.gmra.mxu0 %v1186
  %v1209 = vpop.f32.mrf.mxu0
  %v1210 = vadd.f32 0.0, %v1209
  %v1211 = vpop.f32.mrf.mxu0
  %1212 = vdwg.mxu0
  %1213 = vmatpush.bf16.msra.mxu0 %v409
  %1214 = vmatpush.bf16.msra.mxu0 %v405
  %1215 = vmatpush.bf16.msra.mxu0 %v401
  %1216 = vmatpush.bf16.msra.mxu0 %v397
  %1217 = vmatpush.bf16.msra.mxu0 %v393
  %1218 = vmatpush.bf16.msra.mxu0 %v389
  %1219 = vmatpush.bf16.msra.mxu0 %v385
  %1220 = vmatpush.bf16.msra.mxu0 %v381
  %1221 = vmatmul.bf16.gmra.mxu0 %v1186
  %v1222 = vpop.f32.mrf.mxu0
  %v1223 = vadd.f32 0.0, %v1222
  %v1224 = vpop.f32.mrf.mxu0
  %1225 = vdwg.mxu0
  %1226 = vmatpush.bf16.msra.mxu0 %v410
  %1227 = vmatpush.bf16.msra.mxu0 %v406
  %1228 = vmatpush.bf16.msra.mxu0 %v402
  %1229 = vmatpush.bf16.msra.mxu0 %v398
  %1230 = vmatpush.bf16.msra.mxu0 %v394
  %1231 = vmatpush.bf16.msra.mxu0 %v390
  %1232 = vmatpush.bf16.msra.mxu0 %v386
  %1233 = vmatpush.bf16.msra.mxu0 %v382
  %1234 = vmatmul.bf16.gmra.mxu0 %v1186
  %v1235 = vpop.f32.mrf.mxu0
  %v1236 = vadd.f32 0.0, %v1235
  %v1237 = vpop.f32.mrf.mxu0
  %1238 = vdwg.mxu0
  %v1239 = vadd.f32 %v1182, %v1197
  %v1240 = vadd.f32 %v1183, %v1210
  %v1241 = vadd.f32 %v1184, %v1223
  %v1242 = vadd.f32 %v1185, %v1236
  %v1243 = vxor.u32 %v1239, 2147483648
  %v1244 = vmul.f32 %v1243, 1.442695
  %v1245 = vpow.pop %v1244
  %v1246 = vadd.f32 %v1245, 1.0
  %v1247 = vrcp.pop %v1246
  %v1248 = vmul.f32 %v1246, %v1247
  %v1249 = vsub.f32 1.0, %v1248
  %v1250 = vmul.f32 %v1247, %v1249
  %v1251 = vadd.f32 %v1247, %v1250
  %vm1252 = vweird.f32 %v1246
  %vm1253 = vweird.f32 %v1247
  %vm1254 = vmor %vm1252, %vm1253
  %v1255 = vsel %vm1254, %v1247, %v1251
  %v1256 = vand.u32 2147483647, %v1246
  %vm1257 = vcmp.eq.f32.partialorder %v1256, 8.507059e+37
  %v1258 = vand.u32 %v1246, 2147483648
  %v1259 = vor.u32 1.1754944e-38, %v1258
  %v1260 = vsel %vm1257, %v1259, %v1255
  %v1261 = vmul.f32 1.0, %v1260
  %v1262 = vxor.u32 %v1240, 2147483648
  %v1263 = vmul.f32 %v1262, 1.442695
  %v1264 = vpow.pop %v1263
  %v1265 = vadd.f32 %v1264, 1.0
  %v1266 = vrcp.pop %v1265
  %v1267 = vmul.f32 %v1265, %v1266
  %v1268 = vsub.f32 1.0, %v1267
  %v1269 = vmul.f32 %v1266, %v1268
  %v1270 = vadd.f32 %v1266, %v1269
  %vm1271 = vweird.f32 %v1265
  %vm1272 = vweird.f32 %v1266
  %vm1273 = vmor %vm1271, %vm1272
  %v1274 = vsel %vm1273, %v1266, %v1270
  %v1275 = vand.u32 2147483647, %v1265
  %vm1276 = vcmp.eq.f32.partialorder %v1275, 8.507059e+37
  %v1277 = vand.u32 %v1265, 2147483648
  %v1278 = vor.u32 1.1754944e-38, %v1277
  %v1279 = vsel %vm1276, %v1278, %v1274
  %v1280 = vmul.f32 1.0, %v1279
  %v1281 = vtanh.pop %v1241
  %v1282 = vxor.u32 %v1242, 2147483648
  %v1283 = vmul.f32 %v1282, 1.442695
  %v1284 = vpow.pop %v1283
  %v1285 = vadd.f32 %v1284, 1.0
  %v1286 = vrcp.pop %v1285
  %v1287 = vmul.f32 %v1285, %v1286
  %v1288 = vsub.f32 1.0, %v1287
  %v1289 = vmul.f32 %v1286, %v1288
  %v1290 = vadd.f32 %v1286, %v1289
  %vm1291 = vweird.f32 %v1285
  %vm1292 = vweird.f32 %v1286
  %vm1293 = vmor %vm1291, %vm1292
  %v1294 = vsel %vm1293, %v1286, %v1290
  %v1295 = vand.u32 2147483647, %v1285
  %vm1296 = vcmp.eq.f32.partialorder %v1295, 8.507059e+37
  %v1297 = vand.u32 %v1285, 2147483648
  %v1298 = vor.u32 1.1754944e-38, %v1297
  %v1299 = vsel %vm1296, %v1298, %v1294
  %v1300 = vmul.f32 1.0, %v1299
  %v1301 = vmul.f32 %v1280, %v1179
  %v1302 = vmul.f32 %v1261, %v1281
  %v1303 = vadd.f32 %v1301, %v1302
  %v1304 = vtanh.pop %v1303
  %v1305 = vmul.f32 %v1300, %v1304
  %v1306 = vld [vmem:[#allocation2 + $0xe0] sm:$0xff]
  %v1307 = vld [vmem:[#allocation2 + $0xe8] sm:$0xff]
  %v1308 = vld [vmem:[#allocation2 + $0xf0] sm:$0xff]
  %v1309 = vld [vmem:[#allocation2 + $0xf8] sm:$0xff]
  %v1310 = vpack.c.bf16 %v1305, %v1305
  %1311 = vmatpush.bf16.msra.mxu0 %v407
  %1312 = vmatpush.bf16.msra.mxu0 %v403
  %1313 = vmatpush.bf16.msra.mxu0 %v399
  %1314 = vmatpush.bf16.msra.mxu0 %v395
  %1315 = vmatpush.bf16.msra.mxu0 %v391
  %1316 = vmatpush.bf16.msra.mxu0 %v387
  %1317 = vmatpush.bf16.msra.mxu0 %v383
  %1318 = vmatpush.bf16.msra.mxu0 %v379
  %1319 = vmatmul.bf16.gmra.mxu0 %v1310
  %v1320 = vpop.f32.mrf.mxu0
  %v1321 = vadd.f32 0.0, %v1320
  %v1322 = vpop.f32.mrf.mxu0
  %1323 = vdwg.mxu0
  %1324 = vmatpush.bf16.msra.mxu0 %v408
  %1325 = vmatpush.bf16.msra.mxu0 %v404
  %1326 = vmatpush.bf16.msra.mxu0 %v400
  %1327 = vmatpush.bf16.msra.mxu0 %v396
  %1328 = vmatpush.bf16.msra.mxu0 %v392
  %1329 = vmatpush.bf16.msra.mxu0 %v388
  %1330 = vmatpush.bf16.msra.mxu0 %v384
  %1331 = vmatpush.bf16.msra.mxu0 %v380
  %1332 = vmatmul.bf16.gmra.mxu0 %v1310
  %v1333 = vpop.f32.mrf.mxu0
  %v1334 = vadd.f32 0.0, %v1333
  %v1335 = vpop.f32.mrf.mxu0
  %1336 = vdwg.mxu0
  %1337 = vmatpush.bf16.msra.mxu0 %v409
  %1338 = vmatpush.bf16.msra.mxu0 %v405
  %1339 = vmatpush.bf16.msra.mxu0 %v401
  %1340 = vmatpush.bf16.msra.mxu0 %v397
  %1341 = vmatpush.bf16.msra.mxu0 %v393
  %1342 = vmatpush.bf16.msra.mxu0 %v389
  %1343 = vmatpush.bf16.msra.mxu0 %v385
  %1344 = vmatpush.bf16.msra.mxu0 %v381
  %1345 = vmatmul.bf16.gmra.mxu0 %v1310
  %v1346 = vpop.f32.mrf.mxu0
  %v1347 = vadd.f32 0.0, %v1346
  %v1348 = vpop.f32.mrf.mxu0
  %1349 = vdwg.mxu0
  %1350 = vmatpush.bf16.msra.mxu0 %v410
  %1351 = vmatpush.bf16.msra.mxu0 %v406
  %1352 = vmatpush.bf16.msra.mxu0 %v402
  %1353 = vmatpush.bf16.msra.mxu0 %v398
  %1354 = vmatpush.bf16.msra.mxu0 %v394
  %1355 = vmatpush.bf16.msra.mxu0 %v390
  %1356 = vmatpush.bf16.msra.mxu0 %v386
  %1357 = vmatpush.bf16.msra.mxu0 %v382
  %1358 = vmatmul.bf16.gmra.mxu0 %v1310
  %v1359 = vpop.f32.mrf.mxu0
  %v1360 = vadd.f32 0.0, %v1359
  %v1361 = vpop.f32.mrf.mxu0
  %1362 = vdwg.mxu0
  %v1363 = vadd.f32 %v1306, %v1321
  %v1364 = vadd.f32 %v1307, %v1334
  %v1365 = vadd.f32 %v1308, %v1347
  %v1366 = vadd.f32 %v1309, %v1360
  %v1367 = vxor.u32 %v1363, 2147483648
  %v1368 = vmul.f32 %v1367, 1.442695
  %v1369 = vpow.pop %v1368
  %v1370 = vadd.f32 %v1369, 1.0
  %v1371 = vrcp.pop %v1370
  %v1372 = vmul.f32 %v1370, %v1371
  %v1373 = vsub.f32 1.0, %v1372
  %v1374 = vmul.f32 %v1371, %v1373
  %v1375 = vadd.f32 %v1371, %v1374
  %vm1376 = vweird.f32 %v1370
  %vm1377 = vweird.f32 %v1371
  %vm1378 = vmor %vm1376, %vm1377
  %v1379 = vsel %vm1378, %v1371, %v1375
  %v1380 = vand.u32 2147483647, %v1370
  %vm1381 = vcmp.eq.f32.partialorder %v1380, 8.507059e+37
  %v1382 = vand.u32 %v1370, 2147483648
  %v1383 = vor.u32 1.1754944e-38, %v1382
  %v1384 = vsel %vm1381, %v1383, %v1379
  %v1385 = vmul.f32 1.0, %v1384
  %v1386 = vxor.u32 %v1364, 2147483648
  %v1387 = vmul.f32 %v1386, 1.442695
  %v1388 = vpow.pop %v1387
  %v1389 = vadd.f32 %v1388, 1.0
  %v1390 = vrcp.pop %v1389
  %v1391 = vmul.f32 %v1389, %v1390
  %v1392 = vsub.f32 1.0, %v1391
  %v1393 = vmul.f32 %v1390, %v1392
  %v1394 = vadd.f32 %v1390, %v1393
  %vm1395 = vweird.f32 %v1389
  %vm1396 = vweird.f32 %v1390
  %vm1397 = vmor %vm1395, %vm1396
  %v1398 = vsel %vm1397, %v1390, %v1394
  %v1399 = vand.u32 2147483647, %v1389
  %vm1400 = vcmp.eq.f32.partialorder %v1399, 8.507059e+37
  %v1401 = vand.u32 %v1389, 2147483648
  %v1402 = vor.u32 1.1754944e-38, %v1401
  %v1403 = vsel %vm1400, %v1402, %v1398
  %v1404 = vmul.f32 1.0, %v1403
  %v1405 = vtanh.pop %v1365
  %v1406 = vxor.u32 %v1366, 2147483648
  %v1407 = vmul.f32 %v1406, 1.442695
  %v1408 = vpow.pop %v1407
  %v1409 = vadd.f32 %v1408, 1.0
  %v1410 = vrcp.pop %v1409
  %v1411 = vmul.f32 %v1409, %v1410
  %v1412 = vsub.f32 1.0, %v1411
  %v1413 = vmul.f32 %v1410, %v1412
  %v1414 = vadd.f32 %v1410, %v1413
  %vm1415 = vweird.f32 %v1409
  %vm1416 = vweird.f32 %v1410
  %vm1417 = vmor %vm1415, %vm1416
  %v1418 = vsel %vm1417, %v1410, %v1414
  %v1419 = vand.u32 2147483647, %v1409
  %vm1420 = vcmp.eq.f32.partialorder %v1419, 8.507059e+37
  %v1421 = vand.u32 %v1409, 2147483648
  %v1422 = vor.u32 1.1754944e-38, %v1421
  %v1423 = vsel %vm1420, %v1422, %v1418
  %v1424 = vmul.f32 1.0, %v1423
  %v1425 = vmul.f32 %v1404, %v1303
  %v1426 = vmul.f32 %v1385, %v1405
  %v1427 = vadd.f32 %v1425, %v1426
  %v1428 = vtanh.pop %v1427
  %v1429 = vmul.f32 %v1424, %v1428
  %v1430 = vld [vmem:[%s4] sm:$0xff]
  %v1431 = vld [vmem:[%s4 + $0x8] sm:$0xff]
  %v1432 = vld [vmem:[%s4 + $0x10] sm:$0xff]
  %v1433 = vld [vmem:[%s4 + $0x18] sm:$0xff]
  %v1434 = vld [vmem:[%s4 + $0x20] sm:$0xff]
  %v1435 = vld [vmem:[%s4 + $0x28] sm:$0xff]
  %v1436 = vld [vmem:[%s4 + $0x30] sm:$0xff]
  %v1437 = vld [vmem:[%s4 + $0x38] sm:$0xff]
  %v1438 = vld [vmem:[%s4 + $0x40] sm:$0xff]
  %v1439 = vld [vmem:[%s4 + $0x48] sm:$0xff]
  %v1440 = vld [vmem:[%s4 + $0x50] sm:$0xff]
  %v1441 = vld [vmem:[%s4 + $0x58] sm:$0xff]
  %v1442 = vld [vmem:[%s4 + $0x60] sm:$0xff]
  %v1443 = vld [vmem:[%s4 + $0x68] sm:$0xff]
  %v1444 = vld [vmem:[%s4 + $0x70] sm:$0xff]
  %v1445 = vld [vmem:[%s4 + $0x78] sm:$0xff]
  %v1446 = vld [vmem:[%s5] sm:$0x1]
  %v1448 = vperm.slane %v1446, 0
  %1450 = vmatpush.msra.mxu0 %v1445
  %1451 = vmatpush.msra.mxu0 %v1444
  %1452 = vmatpush.msra.mxu0 %v1443
  %1453 = vmatpush.msra.mxu0 %v1442
  %1454 = vmatpush.msra.mxu0 %v1441
  %1455 = vmatpush.msra.mxu0 %v1440
  %1456 = vmatpush.msra.mxu0 %v1439
  %1457 = vmatpush.msra.mxu0 %v1438
  %1458 = vmatpush.msra.mxu0 %v1437
  %1459 = vmatpush.msra.mxu0 %v1436
  %1460 = vmatpush.msra.mxu0 %v1435
  %1461 = vmatpush.msra.mxu0 %v1434
  %1462 = vmatpush.msra.mxu0 %v1433
  %1463 = vmatpush.msra.mxu0 %v1432
  %1464 = vmatpush.msra.mxu0 %v1431
  %1465 = vmatpush.msra.mxu0 %v1430
  %1466 = vmatmul.f32.gmra.mxu0 %v1429
  %v1467 = vpop.f32.mrf.mxu0
  %v1468 = vadd.f32 %v1448, %v1467
  %1469 = vdwg.mxu0
  %1470 = vst [vmem:[%s6] sm:$0xff] %v1468
  // Predicated region
  $region26: #{rnn_forward.1} parent=0 // pred_check
    _
  $region27: #{rnn_forward.1} parent=0 // pred_check_branch
    %1472 = sbr.rel (0) target = $region29
  $region28: #{rnn_forward.1} parent=0 // pred_region
    _
  $region29: #{rnn_forward.1} parent=0 // pred_fallthru
    _
  // Predicated region
  $region30: #{rnn_forward.1} parent=0 // pred_check
    _
  $region31: #{rnn_forward.1} parent=0 // pred_check_branch
    %1474 = sbr.rel (0) target = $region33
  $region32: #{rnn_forward.1} parent=0 // pred_region
    _
  $region33: #{rnn_forward.1} parent=0 // pred_fallthru
    _

</llo_original>
